<compile_context>
chip_gen: v7x
topology: tpu7x:2x2x1
jax: 0.10.0
libtpu: 0.0.40
codegen_flags: <defaults>
</compile_context>

<pallas_src>
import jax
import jax.numpy as jnp
from jax import lax
from jax.experimental import pallas as pl
from jax.experimental.pallas import tpu as pltpu  # noqa: F401  (TPU backend)

LN_EPS = 1e-5


def _layernorm(x, gamma, beta):
    mu = jnp.mean(x, axis=-1, keepdims=True)
    xc = x - mu
    var = jnp.mean(xc * xc, axis=-1, keepdims=True)
    return xc * lax.rsqrt(var + LN_EPS) * gamma + beta


def _round_up(n, m):
    return ((n + m - 1) // m) * m


def make_transformer2(*, input_dim, emb, heads, depth, output_dim,
                      ff_hidden_mult=4):
    """Returns apply(x, h, mask, params) -> (probs, tokens), matching
    Transformer2.forward in eval mode (dropout=0, if_train=False).
    `apply.pack_params` / `apply.apply_packed` expose the one-time parameter
    re-layout (bf16 + fused QKV + padded toprobs) separately."""
    inv_scale = float(emb) ** (-0.25)     # applied to both q and k (emb**-0.5 total)
    he = heads * emb
    out_pad = _round_up(max(output_dim, 128), 128)   # lane-dense probs store
    tok_pad = _round_up(max(emb, 128), 128)          # lane-dense tokens store

    def kernel(xin_ref, hfull_ref, xmask_ref, mask_ref,
               wemb_ref, bemb_ref,
               wqkv_ref, wu_ref, bu_ref,
               ln1g_ref, ln1b_ref, ln2g_ref, ln2b_ref,
               wf1_ref, bf1_ref, wf2_ref, bf2_ref,
               wp_ref, bp_ref,
               probs_ref, tok_ref):
        bt = xin_ref.shape[0]                        # batch folded into rows

        # ---- token embedding + concat((tokens, h), dim=1), built in vregs ----
        # xin is zero on the h rows, xmask is 1 on x rows / 0 on h rows, hfull
        # holds h on the h rows / 0 elsewhere -> no staging store/reload; the
        # first MXU push issues immediately.
        emb_out = (jnp.dot(xin_ref[...].astype(jnp.bfloat16), wemb_ref[...],
                           preferred_element_type=jnp.float32)
                   + bemb_ref[...])
        tokens0 = emb_out * xmask_ref[...] + hfull_ref[...]          # (bt, emb)

        # tokens output: lane-pad to 128 -> unmasked full-lane store.
        if tok_pad > emb:
            tok_ref[...] = jnp.concatenate(
                [tokens0, jnp.zeros((bt, tok_pad - emb), jnp.float32)], axis=-1)
        else:
            tok_ref[...] = tokens0

        keep = mask_ref[...] != 0      # (bt, bt): block-diag(batch) of user mask

        # TODO(synk): training-time random attention mask (if_mask && if_train,
        # torch.rand < mask_prob) not implemented (eval path only); Dropout has
        # p=0.0 in Transformer2, i.e. identity.
        # TODO(synk): if a user mask row is ever fully zero, the batch-folded
        # softmax spreads uniformly over B*t keys instead of t keys (degenerate
        # case; the reference itself is also degenerate there).
        xcur = tokens0
        for l in range(depth):                                    # static unroll
            xb = xcur.astype(jnp.bfloat16)
            # Fused Q|K|V projection: one MXU push instead of three.
            qkv = jnp.dot(xb, wqkv_ref[l], preferred_element_type=jnp.float32)
            q_all = qkv[:, 0 * he:1 * he] * inv_scale
            k_all = qkv[:, 1 * he:2 * he] * inv_scale
            v_all = qkv[:, 2 * he:3 * he]

            head_outs = []
            for hh in range(heads):                               # static unroll
                lo, hi = hh * emb, (hh + 1) * emb
                # Batch folded into rows; cross-batch entries are masked to
                # -1e9 and exp-underflow to exactly 0 -> equals per-batch attn.
                scores = lax.dot_general(
                    q_all[:, lo:hi].astype(jnp.bfloat16),
                    k_all[:, lo:hi].astype(jnp.bfloat16),
                    (((1,), (1,)), ((), ())),
                    preferred_element_type=jnp.float32)           # (bt, bt)
                scores = jnp.where(keep, scores, -1e9)
                scores = scores - jnp.max(scores, axis=-1, keepdims=True)
                p = jnp.exp(scores)
                attn = p / jnp.sum(p, axis=-1, keepdims=True)     # exact divide
                head_outs.append(
                    jnp.dot(attn.astype(jnp.bfloat16),
                            v_all[:, lo:hi].astype(jnp.bfloat16),
                            preferred_element_type=jnp.float32))

            # concat-over-heads + unifyheads as a single MXU push.
            cat = (jnp.concatenate(head_outs, axis=-1)
                   if heads > 1 else head_outs[0])
            attended = (jnp.dot(cat.astype(jnp.bfloat16), wu_ref[l],
                                preferred_element_type=jnp.float32)
                        + bu_ref[l])

            x1 = _layernorm(attended + xcur, ln1g_ref[l], ln1b_ref[l])
            ffh = jnp.maximum(
                jnp.dot(x1.astype(jnp.bfloat16), wf1_ref[l],
                        preferred_element_type=jnp.float32) + bf1_ref[l], 0.0)
            ffo = (jnp.dot(ffh.astype(jnp.bfloat16), wf2_ref[l],
                           preferred_element_type=jnp.float32) + bf2_ref[l])
            xcur = _layernorm(ffo + x1, ln2g_ref[l], ln2b_ref[l])

        # toprobs: weights zero-padded to 128 output lanes -> lane-dense store.
        probs_ref[...] = (jnp.dot(xcur.astype(jnp.bfloat16), wp_ref[...],
                                  preferred_element_type=jnp.float32)
                          + bp_ref[...])

    def pack_params(params):
        """One-time re-layout: bf16 weights, fused QKV, lane-padded toprobs."""
        (wemb, bemb, wq, wk, wv, wu, bu,
         ln1g, ln1b, ln2g, ln2b, wf1, bf1, wf2, bf2, wp, bp) = params
        bf16 = jnp.bfloat16
        wqkv = jnp.concatenate([wq, wk, wv], axis=-1).astype(bf16)  # (d,emb,3he)
        wp_p = jnp.zeros((emb, out_pad), jnp.float32).at[:, :output_dim].set(wp)
        bp_p = jnp.zeros((1, out_pad), jnp.float32).at[:, :output_dim].set(bp)
        return (wemb.astype(bf16), bemb,
                wqkv, wu.astype(bf16), bu,
                ln1g, ln1b, ln2g, ln2b,
                wf1.astype(bf16), bf1, wf2.astype(bf16), bf2,
                wp_p.astype(bf16), bp_p)

    def apply_packed(x, h, mask, packed):
        b, tx, _ = x.shape
        th = h.shape[1]
        t = tx + th
        bt = b * t
        f32 = jnp.float32

        # Fold batch into the row (M/sublane) axis, keeping the h row slots.
        xin = jnp.concatenate(
            [x.astype(f32), jnp.zeros((b, th, input_dim), f32)],
            axis=1).reshape(bt, input_dim)
        hfull = jnp.concatenate(
            [jnp.zeros((b, tx, emb), f32), h.astype(f32)],
            axis=1).reshape(bt, emb)
        xmask = jnp.concatenate(
            [jnp.ones((b, tx, emb), f32), jnp.zeros((b, th, emb), f32)],
            axis=1).reshape(bt, emb)
        # Block-diagonal attention mask (cross-batch entries masked out).
        big_mask = jnp.kron(jnp.eye(b, dtype=f32), mask.astype(f32))

        out_shape = (jax.ShapeDtypeStruct((bt, out_pad), f32),
                     jax.ShapeDtypeStruct((bt, tok_pad), f32))
        # Single invocation, no grid: every input is a whole-array VMEM block.
        probs_p, tok_p = pl.pallas_call(kernel, out_shape=out_shape)(
            xin, hfull, xmask, big_mask, *packed)

        probs = probs_p[:, :output_dim].reshape(b, t, output_dim)
        tokens = tok_p[:, :emb].reshape(b, t, emb)
        return probs, tokens

    def apply(x, h, mask, params):
        return apply_packed(x, h, mask, pack_params(params))

    apply.pack_params = pack_params
    apply.apply_packed = apply_packed
    return apply


def reference_forward(x, h, mask, params, *, emb, heads, depth):
    """Pure-JAX f32 reference mirroring the PyTorch forward (eval mode)."""
    (wemb, bemb, wq, wk, wv, wu, bu,
     ln1g, ln1b, ln2g, ln2b, wf1, bf1, wf2, bf2, wp, bp) = params
    tokens = jnp.concatenate([x @ wemb + bemb, h], axis=1)
    b, t, _ = tokens.shape
    scale = float(emb) ** (-0.25)
    xcur = tokens
    for l in range(depth):
        q = (xcur @ wq[l]).reshape(b, t, heads, emb) * scale
        k = (xcur @ wk[l]).reshape(b, t, heads, emb) * scale
        v = (xcur @ wv[l]).reshape(b, t, heads, emb)
        dot = jnp.einsum('bqhe,bkhe->bhqk', q, k)
        dot = jnp.where(mask[None, None] != 0, dot, -1e9)
        attn = jax.nn.softmax(dot, axis=-1)
        out = jnp.einsum('bhqk,bkhe->bqhe', attn, v).reshape(b, t, heads * emb)
        attended = out @ wu[l] + bu[l][0]
        x1 = _layernorm(attended + xcur, ln1g[l][0], ln1b[l][0])
        ff = jnp.maximum(x1 @ wf1[l] + bf1[l][0], 0.0) @ wf2[l] + bf2[l][0]
        xcur = _layernorm(ff + x1, ln2g[l][0], ln2b[l][0])
    probs = xcur @ wp + bp
    return probs, tokens


if __name__ == "__main__":
    # Shapes consistent with the module: batch=2, 7 observation tokens + 1
    # recurrent token -> t=8, input_dim=24, emb=32, heads=2, depth=2,
    # output_dim=8, ff_hidden=4*emb=128.
    B, TX, TH = 2, 7, 1
    INPUT_DIM, EMB, HEADS, DEPTH, OUT_DIM = 24, 32, 2, 2, 8
    FF = 4 * EMB
    T = TX + TH

    key = jax.random.PRNGKey(0)
    keys = jax.random.split(key, 16)

    def uni(k, shape, fan_in):
        bound = 1.0 / (fan_in ** 0.5)
        return jax.random.uniform(k, shape, jnp.float32, -bound, bound)

    x = jax.random.normal(keys[0], (B, TX, INPUT_DIM), jnp.float32)
    h = jax.random.normal(keys[1], (B, TH, EMB), jnp.float32) * 0.1
    mask = jnp.ones((T, T), jnp.float32)          # all-visible attention mask

    wemb = uni(keys[2], (INPUT_DIM, EMB), INPUT_DIM)
    bemb = uni(keys[3], (1, EMB), INPUT_DIM)
    wq = uni(keys[4], (DEPTH, EMB, HEADS * EMB), EMB)
    wk = uni(keys[5], (DEPTH, EMB, HEADS * EMB), EMB)
    wv = uni(keys[6], (DEPTH, EMB, HEADS * EMB), EMB)
    wu = uni(keys[7], (DEPTH, HEADS * EMB, EMB), HEADS * EMB)
    bu = uni(keys[8], (DEPTH, 1, EMB), HEADS * EMB)
    ln1g = jnp.ones((DEPTH, 1, EMB), jnp.float32)
    ln1b = jnp.zeros((DEPTH, 1, EMB), jnp.float32)
    ln2g = jnp.ones((DEPTH, 1, EMB), jnp.float32)
    ln2b = jnp.zeros((DEPTH, 1, EMB), jnp.float32)
    wf1 = uni(keys[9], (DEPTH, EMB, FF), EMB)
    bf1 = uni(keys[10], (DEPTH, 1, FF), EMB)
    wf2 = uni(keys[11], (DEPTH, FF, EMB), FF)
    bf2 = uni(keys[12], (DEPTH, 1, EMB), FF)
    wp = uni(keys[13], (EMB, OUT_DIM), EMB)
    bp = uni(keys[14], (1, OUT_DIM), EMB)

    params = (wemb, bemb, wq, wk, wv, wu, bu,
              ln1g, ln1b, ln2g, ln2b, wf1, bf1, wf2, bf2, wp, bp)

    net = make_transformer2(input_dim=INPUT_DIM, emb=EMB, heads=HEADS,
                            depth=DEPTH, output_dim=OUT_DIM)
    packed = net.pack_params(params)              # one-time parameter re-layout
    probs, tokens = net.apply_packed(x, h, mask, packed)
    jax.block_until_ready((probs, tokens))

    assert probs.shape == (B, T, OUT_DIM)
    assert tokens.shape == (B, T, EMB)
    assert bool(jnp.all(jnp.isfinite(probs)))
    assert bool(jnp.all(jnp.isfinite(tokens)))

    ref_probs, ref_tokens = reference_forward(
        x, h, mask, params, emb=EMB, heads=HEADS, depth=DEPTH)
    # Tolerance covers bf16 weight/activation casts on the MXU (softmax divide
    # is exact in this revision).
    assert bool(jnp.allclose(tokens, ref_tokens, atol=5e-2, rtol=5e-2))
    assert bool(jnp.allclose(probs, ref_probs, atol=5e-2, rtol=5e-2))

    print("KERNEL_OK")
</pallas_src>

<mosaic_0001>
module attributes {stable_mosaic.version = 11 : i64} {
  func.func @kernel(%arg0: memref<16x24xf32, #tpu.memory_space<vmem>>, %arg1: memref<16x32xf32, #tpu.memory_space<vmem>>, %arg2: memref<16x32xf32, #tpu.memory_space<vmem>>, %arg3: memref<16x16xf32, #tpu.memory_space<vmem>>, %arg4: memref<24x32xbf16, #tpu.memory_space<vmem>>, %arg5: memref<1x32xf32, #tpu.memory_space<vmem>>, %arg6: memref<2x32x192xbf16, #tpu.memory_space<vmem>>, %arg7: memref<2x64x32xbf16, #tpu.memory_space<vmem>>, %arg8: memref<2x1x32xf32, #tpu.memory_space<vmem>>, %arg9: memref<2x1x32xf32, #tpu.memory_space<vmem>>, %arg10: memref<2x1x32xf32, #tpu.memory_space<vmem>>, %arg11: memref<2x1x32xf32, #tpu.memory_space<vmem>>, %arg12: memref<2x1x32xf32, #tpu.memory_space<vmem>>, %arg13: memref<2x32x128xbf16, #tpu.memory_space<vmem>>, %arg14: memref<2x1x128xf32, #tpu.memory_space<vmem>>, %arg15: memref<2x128x32xbf16, #tpu.memory_space<vmem>>, %arg16: memref<2x1x32xf32, #tpu.memory_space<vmem>>, %arg17: memref<32x128xbf16, #tpu.memory_space<vmem>>, %arg18: memref<1x128xf32, #tpu.memory_space<vmem>>, %arg19: memref<16x128xf32, #tpu.memory_space<vmem>>, %arg20: memref<16x128xf32, #tpu.memory_space<vmem>>) attributes {dimension_semantics = [], scalar_prefetch = 0 : i64, scratch_operands = 0 : i64, tpu.core_type = #tpu.core_type<tc>} {
    %c0 = arith.constant 0 : index
    %c0_0 = arith.constant 0 : index
    %0 = vector.load %arg0[%c0, %c0_0] : memref<16x24xf32, #tpu.memory_space<vmem>>, vector<16x24xf32>
    %1 = arith.truncf %0 : vector<16x24xf32> to vector<16x24xbf16>
    %c0_1 = arith.constant 0 : index
    %c0_2 = arith.constant 0 : index
    %2 = vector.load %arg4[%c0_1, %c0_2] : memref<24x32xbf16, #tpu.memory_space<vmem>>, vector<24x32xbf16>
    %cst = arith.constant dense<0.000000e+00> : vector<16x32xf32>
    %3 = tpu.matmul %1, %2, %cst {dimension_numbers = #tpu.dot_dimension_numbers<[1], [0], [0], [1], [0, 0, 1, 1], [], []>} : vector<16x24xbf16>, vector<24x32xbf16>, vector<16x32xf32> -> vector<16x32xf32>
    %c0_3 = arith.constant 0 : index
    %c0_4 = arith.constant 0 : index
    %4 = vector.load %arg5[%c0_3, %c0_4] : memref<1x32xf32, #tpu.memory_space<vmem>>, vector<1x32xf32>
    %5 = vector.broadcast %4 : vector<1x32xf32> to vector<16x32xf32>
    %6 = arith.addf %3, %5 : vector<16x32xf32>
    %c0_5 = arith.constant 0 : index
    %c0_6 = arith.constant 0 : index
    %7 = vector.load %arg2[%c0_5, %c0_6] : memref<16x32xf32, #tpu.memory_space<vmem>>, vector<16x32xf32>
    %8 = arith.mulf %6, %7 : vector<16x32xf32>
    %c0_7 = arith.constant 0 : index
    %c0_8 = arith.constant 0 : index
    %9 = vector.load %arg1[%c0_7, %c0_8] : memref<16x32xf32, #tpu.memory_space<vmem>>, vector<16x32xf32>
    %10 = arith.addf %8, %9 : vector<16x32xf32>
    %cst_9 = arith.constant 0.000000e+00 : f32
    %11 = vector.broadcast %cst_9 : f32 to vector<16x96xf32>
    %12 = tpu.concatenate %10, %11 in 1 : vector<16x32xf32>, vector<16x96xf32> -> vector<16x128xf32>
    %c0_10 = arith.constant 0 : index
    %c0_11 = arith.constant 0 : index
    %13 = vector.load %arg20[%c0_10, %c0_11] : memref<16x128xf32, #tpu.memory_space<vmem>>, vector<16x128xf32>
    tpu.vector_store %arg20[%c0_10, %c0_11], %12 {strides = array<i32>} : memref<16x128xf32, #tpu.memory_space<vmem>>, vector<16x128xf32>,
    %c0_12 = arith.constant 0 : index
    %c0_13 = arith.constant 0 : index
    %14 = vector.load %arg3[%c0_12, %c0_13] : memref<16x16xf32, #tpu.memory_space<vmem>>, vector<16x16xf32>
    %cst_14 = arith.constant 0.000000e+00 : f32
    %15 = vector.broadcast %cst_14 : f32 to vector<16x16xf32>
    %16 = arith.cmpf one, %14, %15 : vector<16x16xf32>
    %17 = arith.truncf %10 : vector<16x32xf32> to vector<16x32xbf16>
    %c0_15 = arith.constant 0 : index
    %c0_16 = arith.constant 0 : index
    %c0_17 = arith.constant 0 : index
    %18 = vector.load %arg6[%c0_15, %c0_16, %c0_17] : memref<2x32x192xbf16, #tpu.memory_space<vmem>>, vector<1x32x192xbf16>
    %19 = vector.shape_cast %18 : vector<1x32x192xbf16> to vector<32x192xbf16>
    %cst_18 = arith.constant dense<0.000000e+00> : vector<16x192xf32>
    %20 = tpu.matmul %17, %19, %cst_18 {dimension_numbers = #tpu.dot_dimension_numbers<[1], [0], [0], [1], [0, 0, 1, 1], [], []>} : vector<16x32xbf16>, vector<32x192xbf16>, vector<16x192xf32> -> vector<16x192xf32>
    %21 = vector.extract_strided_slice %20 {offsets = [0, 0], sizes = [16, 64], strides = [1, 1]} : vector<16x192xf32> to vector<16x64xf32>
    %cst_19 = arith.constant 0.420448214 : f32
    %22 = vector.broadcast %cst_19 : f32 to vector<16x64xf32>
    %23 = arith.mulf %21, %22 : vector<16x64xf32>
    %24 = vector.extract_strided_slice %20 {offsets = [0, 64], sizes = [16, 64], strides = [1, 1]} : vector<16x192xf32> to vector<16x64xf32>
    %cst_20 = arith.constant 0.420448214 : f32
    %25 = vector.broadcast %cst_20 : f32 to vector<16x64xf32>
    %26 = arith.mulf %24, %25 : vector<16x64xf32>
    %27 = vector.extract_strided_slice %20 {offsets = [0, 128], sizes = [16, 64], strides = [1, 1]} : vector<16x192xf32> to vector<16x64xf32>
    %28 = vector.extract_strided_slice %23 {offsets = [0, 0], sizes = [16, 32], strides = [1, 1]} : vector<16x64xf32> to vector<16x32xf32>
    %29 = arith.truncf %28 : vector<16x32xf32> to vector<16x32xbf16>
    %30 = vector.extract_strided_slice %26 {offsets = [0, 0], sizes = [16, 32], strides = [1, 1]} : vector<16x64xf32> to vector<16x32xf32>
    %31 = arith.truncf %30 : vector<16x32xf32> to vector<16x32xbf16>
    %cst_21 = arith.constant dense<0.000000e+00> : vector<16x16xf32>
    %32 = tpu.matmul %29, %31, %cst_21 {dimension_numbers = #tpu.dot_dimension_numbers<[1], [1], [0], [0], [0, 0, 1, 0], [], []>} : vector<16x32xbf16>, vector<16x32xbf16>, vector<16x16xf32> -> vector<16x16xf32>
    %cst_22 = arith.constant -1.000000e+09 : f32
    %33 = vector.broadcast %cst_22 : f32 to vector<16x16xf32>
    %34 = arith.select %16, %32, %33 : vector<16x16xi1>, vector<16x16xf32>
    %cst_23 = arith.constant dense<0xFF800000> : vector<16xf32>
    %35 = vector.multi_reduction <maximumf>, %34, %cst_23 [1] : vector<16x16xf32> to vector<16xf32>
    %36 = vector.shape_cast %35 : vector<16xf32> to vector<16x1xf32>
    %37 = vector.broadcast %36 : vector<16x1xf32> to vector<16x16xf32>
    %38 = arith.subf %34, %37 : vector<16x16xf32>
    %39 = math.exp %38 : vector<16x16xf32>
    %cst_24 = arith.constant dense<0.000000e+00> : vector<16xf32>
    %40 = vector.multi_reduction <add>, %39, %cst_24 [1] : vector<16x16xf32> to vector<16xf32>
    %41 = vector.shape_cast %40 : vector<16xf32> to vector<16x1xf32>
    %42 = vector.broadcast %41 : vector<16x1xf32> to vector<16x16xf32>
    %43 = arith.divf %39, %42 : vector<16x16xf32>
    %44 = arith.truncf %43 : vector<16x16xf32> to vector<16x16xbf16>
    %45 = vector.extract_strided_slice %27 {offsets = [0, 0], sizes = [16, 32], strides = [1, 1]} : vector<16x64xf32> to vector<16x32xf32>
    %46 = arith.truncf %45 : vector<16x32xf32> to vector<16x32xbf16>
    %cst_25 = arith.constant dense<0.000000e+00> : vector<16x32xf32>
    %47 = tpu.matmul %44, %46, %cst_25 {dimension_numbers = #tpu.dot_dimension_numbers<[1], [0], [0], [1], [0, 0, 1, 1], [], []>} : vector<16x16xbf16>, vector<16x32xbf16>, vector<16x32xf32> -> vector<16x32xf32>
    %48 = vector.extract_strided_slice %23 {offsets = [0, 32], sizes = [16, 32], strides = [1, 1]} : vector<16x64xf32> to vector<16x32xf32>
    %49 = arith.truncf %48 : vector<16x32xf32> to vector<16x32xbf16>
    %50 = vector.extract_strided_slice %26 {offsets = [0, 32], sizes = [16, 32], strides = [1, 1]} : vector<16x64xf32> to vector<16x32xf32>
    %51 = arith.truncf %50 : vector<16x32xf32> to vector<16x32xbf16>
    %cst_26 = arith.constant dense<0.000000e+00> : vector<16x16xf32>
    %52 = tpu.matmul %49, %51, %cst_26 {dimension_numbers = #tpu.dot_dimension_numbers<[1], [1], [0], [0], [0, 0, 1, 0], [], []>} : vector<16x32xbf16>, vector<16x32xbf16>, vector<16x16xf32> -> vector<16x16xf32>
    %cst_27 = arith.constant -1.000000e+09 : f32
    %53 = vector.broadcast %cst_27 : f32 to vector<16x16xf32>
    %54 = arith.select %16, %52, %53 : vector<16x16xi1>, vector<16x16xf32>
    %cst_28 = arith.constant dense<0xFF800000> : vector<16xf32>
    %55 = vector.multi_reduction <maximumf>, %54, %cst_28 [1] : vector<16x16xf32> to vector<16xf32>
    %56 = vector.shape_cast %55 : vector<16xf32> to vector<16x1xf32>
    %57 = vector.broadcast %56 : vector<16x1xf32> to vector<16x16xf32>
    %58 = arith.subf %54, %57 : vector<16x16xf32>
    %59 = math.exp %58 : vector<16x16xf32>
    %cst_29 = arith.constant dense<0.000000e+00> : vector<16xf32>
    %60 = vector.multi_reduction <add>, %59, %cst_29 [1] : vector<16x16xf32> to vector<16xf32>
    %61 = vector.shape_cast %60 : vector<16xf32> to vector<16x1xf32>
    %62 = vector.broadcast %61 : vector<16x1xf32> to vector<16x16xf32>
    %63 = arith.divf %59, %62 : vector<16x16xf32>
    %64 = arith.truncf %63 : vector<16x16xf32> to vector<16x16xbf16>
    %65 = vector.extract_strided_slice %27 {offsets = [0, 32], sizes = [16, 32], strides = [1, 1]} : vector<16x64xf32> to vector<16x32xf32>
    %66 = arith.truncf %65 : vector<16x32xf32> to vector<16x32xbf16>
    %cst_30 = arith.constant dense<0.000000e+00> : vector<16x32xf32>
    %67 = tpu.matmul %64, %66, %cst_30 {dimension_numbers = #tpu.dot_dimension_numbers<[1], [0], [0], [1], [0, 0, 1, 1], [], []>} : vector<16x16xbf16>, vector<16x32xbf16>, vector<16x32xf32> -> vector<16x32xf32>
    %68 = tpu.concatenate %47, %67 in 1 : vector<16x32xf32>, vector<16x32xf32> -> vector<16x64xf32>
    %69 = arith.truncf %68 : vector<16x64xf32> to vector<16x64xbf16>
    %c0_31 = arith.constant 0 : index
    %c0_32 = arith.constant 0 : index
    %c0_33 = arith.constant 0 : index
    %70 = vector.load %arg7[%c0_31, %c0_32, %c0_33] : memref<2x64x32xbf16, #tpu.memory_space<vmem>>, vector<1x64x32xbf16>
    %71 = vector.shape_cast %70 : vector<1x64x32xbf16> to vector<64x32xbf16>
    %cst_34 = arith.constant dense<0.000000e+00> : vector<16x32xf32>
    %72 = tpu.matmul %69, %71, %cst_34 {dimension_numbers = #tpu.dot_dimension_numbers<[1], [0], [0], [1], [0, 0, 1, 1], [], []>} : vector<16x64xbf16>, vector<64x32xbf16>, vector<16x32xf32> -> vector<16x32xf32>
    %c0_35 = arith.constant 0 : index
    %c0_36 = arith.constant 0 : index
    %c0_37 = arith.constant 0 : index
    %73 = vector.load %arg8[%c0_35, %c0_36, %c0_37] : memref<2x1x32xf32, #tpu.memory_space<vmem>>, vector<1x1x32xf32>
    %74 = vector.shape_cast %73 : vector<1x1x32xf32> to vector<1x32xf32>
    %75 = vector.broadcast %74 : vector<1x32xf32> to vector<16x32xf32>
    %76 = arith.addf %72, %75 : vector<16x32xf32>
    %77 = arith.addf %76, %10 : vector<16x32xf32>
    %c0_38 = arith.constant 0 : index
    %c0_39 = arith.constant 0 : index
    %c0_40 = arith.constant 0 : index
    %78 = vector.load %arg9[%c0_38, %c0_39, %c0_40] : memref<2x1x32xf32, #tpu.memory_space<vmem>>, vector<1x1x32xf32>
    %79 = vector.shape_cast %78 : vector<1x1x32xf32> to vector<1x32xf32>
    %c0_41 = arith.constant 0 : index
    %c0_42 = arith.constant 0 : index
    %c0_43 = arith.constant 0 : index
    %80 = vector.load %arg10[%c0_41, %c0_42, %c0_43] : memref<2x1x32xf32, #tpu.memory_space<vmem>>, vector<1x1x32xf32>
    %81 = vector.shape_cast %80 : vector<1x1x32xf32> to vector<1x32xf32>
    %cst_44 = arith.constant dense<0.000000e+00> : vector<16xf32>
    %82 = vector.multi_reduction <add>, %77, %cst_44 [1] : vector<16x32xf32> to vector<16xf32>
    %83 = vector.shape_cast %82 : vector<16xf32> to vector<16x1xf32>
    %cst_45 = arith.constant 3.200000e+01 : f32
    %84 = vector.broadcast %cst_45 : f32 to vector<16x1xf32>
    %85 = arith.divf %83, %84 : vector<16x1xf32>
    %86 = vector.broadcast %85 : vector<16x1xf32> to vector<16x32xf32>
    %87 = arith.subf %77, %86 : vector<16x32xf32>
    %88 = arith.mulf %87, %87 : vector<16x32xf32>
    %cst_46 = arith.constant dense<0.000000e+00> : vector<16xf32>
    %89 = vector.multi_reduction <add>, %88, %cst_46 [1] : vector<16x32xf32> to vector<16xf32>
    %90 = vector.shape_cast %89 : vector<16xf32> to vector<16x1xf32>
    %cst_47 = arith.constant 3.200000e+01 : f32
    %91 = vector.broadcast %cst_47 : f32 to vector<16x1xf32>
    %92 = arith.divf %90, %91 : vector<16x1xf32>
    %cst_48 = arith.constant 9.99999974E-6 : f32
    %93 = vector.broadcast %cst_48 : f32 to vector<16x1xf32>
    %94 = arith.addf %92, %93 : vector<16x1xf32>
    %95 = math.rsqrt %94 : vector<16x1xf32>
    %96 = vector.broadcast %95 : vector<16x1xf32> to vector<16x32xf32>
    %97 = arith.mulf %87, %96 : vector<16x32xf32>
    %98 = vector.broadcast %79 : vector<1x32xf32> to vector<16x32xf32>
    %99 = arith.mulf %97, %98 : vector<16x32xf32>
    %100 = vector.broadcast %81 : vector<1x32xf32> to vector<16x32xf32>
    %101 = arith.addf %99, %100 : vector<16x32xf32>
    %102 = arith.truncf %101 : vector<16x32xf32> to vector<16x32xbf16>
    %c0_49 = arith.constant 0 : index
    %c0_50 = arith.constant 0 : index
    %c0_51 = arith.constant 0 : index
    %103 = vector.load %arg13[%c0_49, %c0_50, %c0_51] : memref<2x32x128xbf16, #tpu.memory_space<vmem>>, vector<1x32x128xbf16>
    %104 = vector.shape_cast %103 : vector<1x32x128xbf16> to vector<32x128xbf16>
    %cst_52 = arith.constant dense<0.000000e+00> : vector<16x128xf32>
    %105 = tpu.matmul %102, %104, %cst_52 {dimension_numbers = #tpu.dot_dimension_numbers<[1], [0], [0], [1], [0, 0, 1, 1], [], []>} : vector<16x32xbf16>, vector<32x128xbf16>, vector<16x128xf32> -> vector<16x128xf32>
    %c0_53 = arith.constant 0 : index
    %c0_54 = arith.constant 0 : index
    %c0_55 = arith.constant 0 : index
    %106 = vector.load %arg14[%c0_53, %c0_54, %c0_55] : memref<2x1x128xf32, #tpu.memory_space<vmem>>, vector<1x1x128xf32>
    %107 = vector.shape_cast %106 : vector<1x1x128xf32> to vector<1x128xf32>
    %108 = vector.broadcast %107 : vector<1x128xf32> to vector<16x128xf32>
    %109 = arith.addf %105, %108 : vector<16x128xf32>
    %cst_56 = arith.constant 0.000000e+00 : f32
    %110 = vector.broadcast %cst_56 : f32 to vector<16x128xf32>
    %111 = arith.maximumf %109, %110 : vector<16x128xf32>
    %112 = arith.truncf %111 : vector<16x128xf32> to vector<16x128xbf16>
    %c0_57 = arith.constant 0 : index
    %c0_58 = arith.constant 0 : index
    %c0_59 = arith.constant 0 : index
    %113 = vector.load %arg15[%c0_57, %c0_58, %c0_59] : memref<2x128x32xbf16, #tpu.memory_space<vmem>>, vector<1x128x32xbf16>
    %114 = vector.shape_cast %113 : vector<1x128x32xbf16> to vector<128x32xbf16>
    %cst_60 = arith.constant dense<0.000000e+00> : vector<16x32xf32>
    %115 = tpu.matmul %112, %114, %cst_60 {dimension_numbers = #tpu.dot_dimension_numbers<[1], [0], [0], [1], [0, 0, 1, 1], [], []>} : vector<16x128xbf16>, vector<128x32xbf16>, vector<16x32xf32> -> vector<16x32xf32>
    %c0_61 = arith.constant 0 : index
    %c0_62 = arith.constant 0 : index
    %c0_63 = arith.constant 0 : index
    %116 = vector.load %arg16[%c0_61, %c0_62, %c0_63] : memref<2x1x32xf32, #tpu.memory_space<vmem>>, vector<1x1x32xf32>
    %117 = vector.shape_cast %116 : vector<1x1x32xf32> to vector<1x32xf32>
    %118 = vector.broadcast %117 : vector<1x32xf32> to vector<16x32xf32>
    %119 = arith.addf %115, %118 : vector<16x32xf32>
    %120 = arith.addf %119, %101 : vector<16x32xf32>
    %c0_64 = arith.constant 0 : index
    %c0_65 = arith.constant 0 : index
    %c0_66 = arith.constant 0 : index
    %121 = vector.load %arg11[%c0_64, %c0_65, %c0_66] : memref<2x1x32xf32, #tpu.memory_space<vmem>>, vector<1x1x32xf32>
    %122 = vector.shape_cast %121 : vector<1x1x32xf32> to vector<1x32xf32>
    %c0_67 = arith.constant 0 : index
    %c0_68 = arith.constant 0 : index
    %c0_69 = arith.constant 0 : index
    %123 = vector.load %arg12[%c0_67, %c0_68, %c0_69] : memref<2x1x32xf32, #tpu.memory_space<vmem>>, vector<1x1x32xf32>
    %124 = vector.shape_cast %123 : vector<1x1x32xf32> to vector<1x32xf32>
    %cst_70 = arith.constant dense<0.000000e+00> : vector<16xf32>
    %125 = vector.multi_reduction <add>, %120, %cst_70 [1] : vector<16x32xf32> to vector<16xf32>
    %126 = vector.shape_cast %125 : vector<16xf32> to vector<16x1xf32>
    %cst_71 = arith.constant 3.200000e+01 : f32
    %127 = vector.broadcast %cst_71 : f32 to vector<16x1xf32>
    %128 = arith.divf %126, %127 : vector<16x1xf32>
    %129 = vector.broadcast %128 : vector<16x1xf32> to vector<16x32xf32>
    %130 = arith.subf %120, %129 : vector<16x32xf32>
    %131 = arith.mulf %130, %130 : vector<16x32xf32>
    %cst_72 = arith.constant dense<0.000000e+00> : vector<16xf32>
    %132 = vector.multi_reduction <add>, %131, %cst_72 [1] : vector<16x32xf32> to vector<16xf32>
    %133 = vector.shape_cast %132 : vector<16xf32> to vector<16x1xf32>
    %cst_73 = arith.constant 3.200000e+01 : f32
    %134 = vector.broadcast %cst_73 : f32 to vector<16x1xf32>
    %135 = arith.divf %133, %134 : vector<16x1xf32>
    %cst_74 = arith.constant 9.99999974E-6 : f32
    %136 = vector.broadcast %cst_74 : f32 to vector<16x1xf32>
    %137 = arith.addf %135, %136 : vector<16x1xf32>
    %138 = math.rsqrt %137 : vector<16x1xf32>
    %139 = vector.broadcast %138 : vector<16x1xf32> to vector<16x32xf32>
    %140 = arith.mulf %130, %139 : vector<16x32xf32>
    %141 = vector.broadcast %122 : vector<1x32xf32> to vector<16x32xf32>
    %142 = arith.mulf %140, %141 : vector<16x32xf32>
    %143 = vector.broadcast %124 : vector<1x32xf32> to vector<16x32xf32>
    %144 = arith.addf %142, %143 : vector<16x32xf32>
    %145 = arith.truncf %144 : vector<16x32xf32> to vector<16x32xbf16>
    %c1 = arith.constant 1 : index
    %c0_75 = arith.constant 0 : index
    %c0_76 = arith.constant 0 : index
    %146 = vector.load %arg6[%c1, %c0_75, %c0_76] : memref<2x32x192xbf16, #tpu.memory_space<vmem>>, vector<1x32x192xbf16>
    %147 = vector.shape_cast %146 : vector<1x32x192xbf16> to vector<32x192xbf16>
    %cst_77 = arith.constant dense<0.000000e+00> : vector<16x192xf32>
    %148 = tpu.matmul %145, %147, %cst_77 {dimension_numbers = #tpu.dot_dimension_numbers<[1], [0], [0], [1], [0, 0, 1, 1], [], []>} : vector<16x32xbf16>, vector<32x192xbf16>, vector<16x192xf32> -> vector<16x192xf32>
    %149 = vector.extract_strided_slice %148 {offsets = [0, 0], sizes = [16, 64], strides = [1, 1]} : vector<16x192xf32> to vector<16x64xf32>
    %cst_78 = arith.constant 0.420448214 : f32
    %150 = vector.broadcast %cst_78 : f32 to vector<16x64xf32>
    %151 = arith.mulf %149, %150 : vector<16x64xf32>
    %152 = vector.extract_strided_slice %148 {offsets = [0, 64], sizes = [16, 64], strides = [1, 1]} : vector<16x192xf32> to vector<16x64xf32>
    %cst_79 = arith.constant 0.420448214 : f32
    %153 = vector.broadcast %cst_79 : f32 to vector<16x64xf32>
    %154 = arith.mulf %152, %153 : vector<16x64xf32>
    %155 = vector.extract_strided_slice %148 {offsets = [0, 128], sizes = [16, 64], strides = [1, 1]} : vector<16x192xf32> to vector<16x64xf32>
    %156 = vector.extract_strided_slice %151 {offsets = [0, 0], sizes = [16, 32], strides = [1, 1]} : vector<16x64xf32> to vector<16x32xf32>
    %157 = arith.truncf %156 : vector<16x32xf32> to vector<16x32xbf16>
    %158 = vector.extract_strided_slice %154 {offsets = [0, 0], sizes = [16, 32], strides = [1, 1]} : vector<16x64xf32> to vector<16x32xf32>
    %159 = arith.truncf %158 : vector<16x32xf32> to vector<16x32xbf16>
    %cst_80 = arith.constant dense<0.000000e+00> : vector<16x16xf32>
    %160 = tpu.matmul %157, %159, %cst_80 {dimension_numbers = #tpu.dot_dimension_numbers<[1], [1], [0], [0], [0, 0, 1, 0], [], []>} : vector<16x32xbf16>, vector<16x32xbf16>, vector<16x16xf32> -> vector<16x16xf32>
    %cst_81 = arith.constant -1.000000e+09 : f32
    %161 = vector.broadcast %cst_81 : f32 to vector<16x16xf32>
    %162 = arith.select %16, %160, %161 : vector<16x16xi1>, vector<16x16xf32>
    %cst_82 = arith.constant dense<0xFF800000> : vector<16xf32>
    %163 = vector.multi_reduction <maximumf>, %162, %cst_82 [1] : vector<16x16xf32> to vector<16xf32>
    %164 = vector.shape_cast %163 : vector<16xf32> to vector<16x1xf32>
    %165 = vector.broadcast %164 : vector<16x1xf32> to vector<16x16xf32>
    %166 = arith.subf %162, %165 : vector<16x16xf32>
    %167 = math.exp %166 : vector<16x16xf32>
    %cst_83 = arith.constant dense<0.000000e+00> : vector<16xf32>
    %168 = vector.multi_reduction <add>, %167, %cst_83 [1] : vector<16x16xf32> to vector<16xf32>
    %169 = vector.shape_cast %168 : vector<16xf32> to vector<16x1xf32>
    %170 = vector.broadcast %169 : vector<16x1xf32> to vector<16x16xf32>
    %171 = arith.divf %167, %170 : vector<16x16xf32>
    %172 = arith.truncf %171 : vector<16x16xf32> to vector<16x16xbf16>
    %173 = vector.extract_strided_slice %155 {offsets = [0, 0], sizes = [16, 32], strides = [1, 1]} : vector<16x64xf32> to vector<16x32xf32>
    %174 = arith.truncf %173 : vector<16x32xf32> to vector<16x32xbf16>
    %cst_84 = arith.constant dense<0.000000e+00> : vector<16x32xf32>
    %175 = tpu.matmul %172, %174, %cst_84 {dimension_numbers = #tpu.dot_dimension_numbers<[1], [0], [0], [1], [0, 0, 1, 1], [], []>} : vector<16x16xbf16>, vector<16x32xbf16>, vector<16x32xf32> -> vector<16x32xf32>
    %176 = vector.extract_strided_slice %151 {offsets = [0, 32], sizes = [16, 32], strides = [1, 1]} : vector<16x64xf32> to vector<16x32xf32>
    %177 = arith.truncf %176 : vector<16x32xf32> to vector<16x32xbf16>
    %178 = vector.extract_strided_slice %154 {offsets = [0, 32], sizes = [16, 32], strides = [1, 1]} : vector<16x64xf32> to vector<16x32xf32>
    %179 = arith.truncf %178 : vector<16x32xf32> to vector<16x32xbf16>
    %cst_85 = arith.constant dense<0.000000e+00> : vector<16x16xf32>
    %180 = tpu.matmul %177, %179, %cst_85 {dimension_numbers = #tpu.dot_dimension_numbers<[1], [1], [0], [0], [0, 0, 1, 0], [], []>} : vector<16x32xbf16>, vector<16x32xbf16>, vector<16x16xf32> -> vector<16x16xf32>
    %cst_86 = arith.constant -1.000000e+09 : f32
    %181 = vector.broadcast %cst_86 : f32 to vector<16x16xf32>
    %182 = arith.select %16, %180, %181 : vector<16x16xi1>, vector<16x16xf32>
    %cst_87 = arith.constant dense<0xFF800000> : vector<16xf32>
    %183 = vector.multi_reduction <maximumf>, %182, %cst_87 [1] : vector<16x16xf32> to vector<16xf32>
    %184 = vector.shape_cast %183 : vector<16xf32> to vector<16x1xf32>
    %185 = vector.broadcast %184 : vector<16x1xf32> to vector<16x16xf32>
    %186 = arith.subf %182, %185 : vector<16x16xf32>
    %187 = math.exp %186 : vector<16x16xf32>
    %cst_88 = arith.constant dense<0.000000e+00> : vector<16xf32>
    %188 = vector.multi_reduction <add>, %187, %cst_88 [1] : vector<16x16xf32> to vector<16xf32>
    %189 = vector.shape_cast %188 : vector<16xf32> to vector<16x1xf32>
    %190 = vector.broadcast %189 : vector<16x1xf32> to vector<16x16xf32>
    %191 = arith.divf %187, %190 : vector<16x16xf32>
    %192 = arith.truncf %191 : vector<16x16xf32> to vector<16x16xbf16>
    %193 = vector.extract_strided_slice %155 {offsets = [0, 32], sizes = [16, 32], strides = [1, 1]} : vector<16x64xf32> to vector<16x32xf32>
    %194 = arith.truncf %193 : vector<16x32xf32> to vector<16x32xbf16>
    %cst_89 = arith.constant dense<0.000000e+00> : vector<16x32xf32>
    %195 = tpu.matmul %192, %194, %cst_89 {dimension_numbers = #tpu.dot_dimension_numbers<[1], [0], [0], [1], [0, 0, 1, 1], [], []>} : vector<16x16xbf16>, vector<16x32xbf16>, vector<16x32xf32> -> vector<16x32xf32>
    %196 = tpu.concatenate %175, %195 in 1 : vector<16x32xf32>, vector<16x32xf32> -> vector<16x64xf32>
    %197 = arith.truncf %196 : vector<16x64xf32> to vector<16x64xbf16>
    %c1_90 = arith.constant 1 : index
    %c0_91 = arith.constant 0 : index
    %c0_92 = arith.constant 0 : index
    %198 = vector.load %arg7[%c1_90, %c0_91, %c0_92] : memref<2x64x32xbf16, #tpu.memory_space<vmem>>, vector<1x64x32xbf16>
    %199 = vector.shape_cast %198 : vector<1x64x32xbf16> to vector<64x32xbf16>
    %cst_93 = arith.constant dense<0.000000e+00> : vector<16x32xf32>
    %200 = tpu.matmul %197, %199, %cst_93 {dimension_numbers = #tpu.dot_dimension_numbers<[1], [0], [0], [1], [0, 0, 1, 1], [], []>} : vector<16x64xbf16>, vector<64x32xbf16>, vector<16x32xf32> -> vector<16x32xf32>
    %c1_94 = arith.constant 1 : index
    %c0_95 = arith.constant 0 : index
    %c0_96 = arith.constant 0 : index
    %201 = vector.load %arg8[%c1_94, %c0_95, %c0_96] : memref<2x1x32xf32, #tpu.memory_space<vmem>>, vector<1x1x32xf32>
    %202 = vector.shape_cast %201 : vector<1x1x32xf32> to vector<1x32xf32>
    %203 = vector.broadcast %202 : vector<1x32xf32> to vector<16x32xf32>
    %204 = arith.addf %200, %203 : vector<16x32xf32>
    %205 = arith.addf %204, %144 : vector<16x32xf32>
    %c1_97 = arith.constant 1 : index
    %c0_98 = arith.constant 0 : index
    %c0_99 = arith.constant 0 : index
    %206 = vector.load %arg9[%c1_97, %c0_98, %c0_99] : memref<2x1x32xf32, #tpu.memory_space<vmem>>, vector<1x1x32xf32>
    %207 = vector.shape_cast %206 : vector<1x1x32xf32> to vector<1x32xf32>
    %c1_100 = arith.constant 1 : index
    %c0_101 = arith.constant 0 : index
    %c0_102 = arith.constant 0 : index
    %208 = vector.load %arg10[%c1_100, %c0_101, %c0_102] : memref<2x1x32xf32, #tpu.memory_space<vmem>>, vector<1x1x32xf32>
    %209 = vector.shape_cast %208 : vector<1x1x32xf32> to vector<1x32xf32>
    %cst_103 = arith.constant dense<0.000000e+00> : vector<16xf32>
    %210 = vector.multi_reduction <add>, %205, %cst_103 [1] : vector<16x32xf32> to vector<16xf32>
    %211 = vector.shape_cast %210 : vector<16xf32> to vector<16x1xf32>
    %cst_104 = arith.constant 3.200000e+01 : f32
    %212 = vector.broadcast %cst_104 : f32 to vector<16x1xf32>
    %213 = arith.divf %211, %212 : vector<16x1xf32>
    %214 = vector.broadcast %213 : vector<16x1xf32> to vector<16x32xf32>
    %215 = arith.subf %205, %214 : vector<16x32xf32>
    %216 = arith.mulf %215, %215 : vector<16x32xf32>
    %cst_105 = arith.constant dense<0.000000e+00> : vector<16xf32>
    %217 = vector.multi_reduction <add>, %216, %cst_105 [1] : vector<16x32xf32> to vector<16xf32>
    %218 = vector.shape_cast %217 : vector<16xf32> to vector<16x1xf32>
    %cst_106 = arith.constant 3.200000e+01 : f32
    %219 = vector.broadcast %cst_106 : f32 to vector<16x1xf32>
    %220 = arith.divf %218, %219 : vector<16x1xf32>
    %cst_107 = arith.constant 9.99999974E-6 : f32
    %221 = vector.broadcast %cst_107 : f32 to vector<16x1xf32>
    %222 = arith.addf %220, %221 : vector<16x1xf32>
    %223 = math.rsqrt %222 : vector<16x1xf32>
    %224 = vector.broadcast %223 : vector<16x1xf32> to vector<16x32xf32>
    %225 = arith.mulf %215, %224 : vector<16x32xf32>
    %226 = vector.broadcast %207 : vector<1x32xf32> to vector<16x32xf32>
    %227 = arith.mulf %225, %226 : vector<16x32xf32>
    %228 = vector.broadcast %209 : vector<1x32xf32> to vector<16x32xf32>
    %229 = arith.addf %227, %228 : vector<16x32xf32>
    %230 = arith.truncf %229 : vector<16x32xf32> to vector<16x32xbf16>
    %c1_108 = arith.constant 1 : index
    %c0_109 = arith.constant 0 : index
    %c0_110 = arith.constant 0 : index
    %231 = vector.load %arg13[%c1_108, %c0_109, %c0_110] : memref<2x32x128xbf16, #tpu.memory_space<vmem>>, vector<1x32x128xbf16>
    %232 = vector.shape_cast %231 : vector<1x32x128xbf16> to vector<32x128xbf16>
    %cst_111 = arith.constant dense<0.000000e+00> : vector<16x128xf32>
    %233 = tpu.matmul %230, %232, %cst_111 {dimension_numbers = #tpu.dot_dimension_numbers<[1], [0], [0], [1], [0, 0, 1, 1], [], []>} : vector<16x32xbf16>, vector<32x128xbf16>, vector<16x128xf32> -> vector<16x128xf32>
    %c1_112 = arith.constant 1 : index
    %c0_113 = arith.constant 0 : index
    %c0_114 = arith.constant 0 : index
    %234 = vector.load %arg14[%c1_112, %c0_113, %c0_114] : memref<2x1x128xf32, #tpu.memory_space<vmem>>, vector<1x1x128xf32>
    %235 = vector.shape_cast %234 : vector<1x1x128xf32> to vector<1x128xf32>
    %236 = vector.broadcast %235 : vector<1x128xf32> to vector<16x128xf32>
    %237 = arith.addf %233, %236 : vector<16x128xf32>
    %cst_115 = arith.constant 0.000000e+00 : f32
    %238 = vector.broadcast %cst_115 : f32 to vector<16x128xf32>
    %239 = arith.maximumf %237, %238 : vector<16x128xf32>
    %240 = arith.truncf %239 : vector<16x128xf32> to vector<16x128xbf16>
    %c1_116 = arith.constant 1 : index
    %c0_117 = arith.constant 0 : index
    %c0_118 = arith.constant 0 : index
    %241 = vector.load %arg15[%c1_116, %c0_117, %c0_118] : memref<2x128x32xbf16, #tpu.memory_space<vmem>>, vector<1x128x32xbf16>
    %242 = vector.shape_cast %241 : vector<1x128x32xbf16> to vector<128x32xbf16>
    %cst_119 = arith.constant dense<0.000000e+00> : vector<16x32xf32>
    %243 = tpu.matmul %240, %242, %cst_119 {dimension_numbers = #tpu.dot_dimension_numbers<[1], [0], [0], [1], [0, 0, 1, 1], [], []>} : vector<16x128xbf16>, vector<128x32xbf16>, vector<16x32xf32> -> vector<16x32xf32>
    %c1_120 = arith.constant 1 : index
    %c0_121 = arith.constant 0 : index
    %c0_122 = arith.constant 0 : index
    %244 = vector.load %arg16[%c1_120, %c0_121, %c0_122] : memref<2x1x32xf32, #tpu.memory_space<vmem>>, vector<1x1x32xf32>
    %245 = vector.shape_cast %244 : vector<1x1x32xf32> to vector<1x32xf32>
    %246 = vector.broadcast %245 : vector<1x32xf32> to vector<16x32xf32>
    %247 = arith.addf %243, %246 : vector<16x32xf32>
    %248 = arith.addf %247, %229 : vector<16x32xf32>
    %c1_123 = arith.constant 1 : index
    %c0_124 = arith.constant 0 : index
    %c0_125 = arith.constant 0 : index
    %249 = vector.load %arg11[%c1_123, %c0_124, %c0_125] : memref<2x1x32xf32, #tpu.memory_space<vmem>>, vector<1x1x32xf32>
    %250 = vector.shape_cast %249 : vector<1x1x32xf32> to vector<1x32xf32>
    %c1_126 = arith.constant 1 : index
    %c0_127 = arith.constant 0 : index
    %c0_128 = arith.constant 0 : index
    %251 = vector.load %arg12[%c1_126, %c0_127, %c0_128] : memref<2x1x32xf32, #tpu.memory_space<vmem>>, vector<1x1x32xf32>
    %252 = vector.shape_cast %251 : vector<1x1x32xf32> to vector<1x32xf32>
    %cst_129 = arith.constant dense<0.000000e+00> : vector<16xf32>
    %253 = vector.multi_reduction <add>, %248, %cst_129 [1] : vector<16x32xf32> to vector<16xf32>
    %254 = vector.shape_cast %253 : vector<16xf32> to vector<16x1xf32>
    %cst_130 = arith.constant 3.200000e+01 : f32
    %255 = vector.broadcast %cst_130 : f32 to vector<16x1xf32>
    %256 = arith.divf %254, %255 : vector<16x1xf32>
    %257 = vector.broadcast %256 : vector<16x1xf32> to vector<16x32xf32>
    %258 = arith.subf %248, %257 : vector<16x32xf32>
    %259 = arith.mulf %258, %258 : vector<16x32xf32>
    %cst_131 = arith.constant dense<0.000000e+00> : vector<16xf32>
    %260 = vector.multi_reduction <add>, %259, %cst_131 [1] : vector<16x32xf32> to vector<16xf32>
    %261 = vector.shape_cast %260 : vector<16xf32> to vector<16x1xf32>
    %cst_132 = arith.constant 3.200000e+01 : f32
    %262 = vector.broadcast %cst_132 : f32 to vector<16x1xf32>
    %263 = arith.divf %261, %262 : vector<16x1xf32>
    %cst_133 = arith.constant 9.99999974E-6 : f32
    %264 = vector.broadcast %cst_133 : f32 to vector<16x1xf32>
    %265 = arith.addf %263, %264 : vector<16x1xf32>
    %266 = math.rsqrt %265 : vector<16x1xf32>
    %267 = vector.broadcast %266 : vector<16x1xf32> to vector<16x32xf32>
    %268 = arith.mulf %258, %267 : vector<16x32xf32>
    %269 = vector.broadcast %250 : vector<1x32xf32> to vector<16x32xf32>
    %270 = arith.mulf %268, %269 : vector<16x32xf32>
    %271 = vector.broadcast %252 : vector<1x32xf32> to vector<16x32xf32>
    %272 = arith.addf %270, %271 : vector<16x32xf32>
    %273 = arith.truncf %272 : vector<16x32xf32> to vector<16x32xbf16>
    %c0_134 = arith.constant 0 : index
    %c0_135 = arith.constant 0 : index
    %274 = vector.load %arg17[%c0_134, %c0_135] : memref<32x128xbf16, #tpu.memory_space<vmem>>, vector<32x128xbf16>
    %cst_136 = arith.constant dense<0.000000e+00> : vector<16x128xf32>
    %275 = tpu.matmul %273, %274, %cst_136 {dimension_numbers = #tpu.dot_dimension_numbers<[1], [0], [0], [1], [0, 0, 1, 1], [], []>} : vector<16x32xbf16>, vector<32x128xbf16>, vector<16x128xf32> -> vector<16x128xf32>
    %c0_137 = arith.constant 0 : index
    %c0_138 = arith.constant 0 : index
    %276 = vector.load %arg18[%c0_137, %c0_138] : memref<1x128xf32, #tpu.memory_space<vmem>>, vector<1x128xf32>
    %277 = vector.broadcast %276 : vector<1x128xf32> to vector<16x128xf32>
    %278 = arith.addf %275, %277 : vector<16x128xf32>
    %c0_139 = arith.constant 0 : index
    %c0_140 = arith.constant 0 : index
    %279 = vector.load %arg19[%c0_139, %c0_140] : memref<16x128xf32, #tpu.memory_space<vmem>>, vector<16x128xf32>
    tpu.vector_store %arg19[%c0_139, %c0_140], %278 {strides = array<i32>} : memref<16x128xf32, #tpu.memory_space<vmem>>, vector<16x128xf32>,
    return
  }
}

</mosaic_0001>

<llo_original>
// kernel: tpu_custom_call.1
$region0: #{tpu_custom_call.1}
  #allocation0 [shape = 'u32[]', space=smem, size = 0x4, offset = 0x4, fixed_abs, tag = 'smem constant byte address 0x4 - core index']
  #allocation1 [shape = 'u32[144,128]{1,0:T(1,128)}', space=vmem, size = 0x12000, scoped, tag = 'internal scratch']
  %s0 = inlined_call_operand.vmem [shape: f32[16,24], index: 0, kind: input, shape index: {}]
  %s1 = inlined_call_operand.vmem [shape: f32[16,32], index: 1, kind: input, shape index: {}]
  %s2 = inlined_call_operand.vmem [shape: f32[16,32], index: 2, kind: input, shape index: {}]
  %s3 = inlined_call_operand.vmem [shape: f32[16,16], index: 3, kind: input, shape index: {}]
  %s4 = inlined_call_operand.vmem [shape: bf16[24,32], index: 4, kind: input, shape index: {}]
  %s5 = inlined_call_operand.vmem [shape: f32[1,32], index: 5, kind: input, shape index: {}]
  %s6 = inlined_call_operand.vmem [shape: bf16[2,32,192], index: 6, kind: input, shape index: {}]
  %s7 = inlined_call_operand.vmem [shape: bf16[2,64,32], index: 7, kind: input, shape index: {}]
  %s8 = inlined_call_operand.vmem [shape: f32[2,1,32], index: 8, kind: input, shape index: {}]
  %s9 = inlined_call_operand.vmem [shape: f32[2,1,32], index: 9, kind: input, shape index: {}]
  %s10 = inlined_call_operand.vmem [shape: f32[2,1,32], index: 10, kind: input, shape index: {}]
  %s11 = inlined_call_operand.vmem [shape: f32[2,1,32], index: 11, kind: input, shape index: {}]
  %s12 = inlined_call_operand.vmem [shape: f32[2,1,32], index: 12, kind: input, shape index: {}]
  %s13 = inlined_call_operand.vmem [shape: bf16[2,32,128], index: 13, kind: input, shape index: {}]
  %s14 = inlined_call_operand.vmem [shape: f32[2,1,128], index: 14, kind: input, shape index: {}]
  %s15 = inlined_call_operand.vmem [shape: bf16[2,128,32], index: 15, kind: input, shape index: {}]
  %s16 = inlined_call_operand.vmem [shape: f32[2,1,32], index: 16, kind: input, shape index: {}]
  %s17 = inlined_call_operand.vmem [shape: bf16[32,128], index: 17, kind: input, shape index: {}]
  %s18 = inlined_call_operand.vmem [shape: f32[1,128], index: 18, kind: input, shape index: {}]
  %s19 = inlined_call_operand.hbm [shape: f32[16,128], index: 19, kind: output, shape index: {0}]
  %s20 = inlined_call_operand.hbm [shape: f32[16,128], index: 20, kind: output, shape index: {1}]
  %21 = xla_tuple %s19, %s20
  %s22 = sld [smem:[#allocation0]]
  $region94: #{tpu_custom_call.1} parent=0
    _
  %s24 = ssub.s32 1, %s22
  %s25 = scalar_select 0, %s24, %s22
  $region1: #{tpu_custom_call.1} parent=0
    #allocation2 [shape = 'u8[8192]{0}', space=vmem, size = 0x2000, scoped, tag = 'output window, operand 0, single buffered']
    #allocation3 [shape = 's32[1]{0}', space=sflag, size = 0x4, scoped, tag = 'scoped memory for tpu_custom_call.1']
    #allocation4 [shape = 'u8[8192]{0}', space=vmem, size = 0x2000, scoped, tag = 'output window, operand 1, single buffered']
    #allocation5 [shape = 's32[1]{0}', space=sflag, size = 0x4, scoped, tag = 'scoped memory for tpu_custom_call.1']
    %26 = vsyncpa [#allocation3], 0
    %27 = vsyncpa [#allocation5], 0
    // Predicated region
    $region2: #{tpu_custom_call.1} parent=1 // pred_check
      _
    $region3: #{tpu_custom_call.1} parent=1 // pred_check_branch
      %29 = sbr.rel (0) target = $region5
    $region4: #{tpu_custom_call.1} parent=1 // pred_region
      _
    $region5: #{tpu_custom_call.1} parent=1 // pred_fallthru
      _
    // Predicated region
    $region6: #{tpu_custom_call.1} parent=1 // pred_check
      _
    $region7: #{tpu_custom_call.1} parent=1 // pred_check_branch
      %31 = sbr.rel (0) target = $region9
    $region8: #{tpu_custom_call.1} parent=1 // pred_region
      _
    $region9: #{tpu_custom_call.1} parent=1 // pred_fallthru
      _
    // Predicated region
    $region10: #{tpu_custom_call.1} parent=1 // pred_check
      _
    $region11: #{tpu_custom_call.1} parent=1 // pred_check_branch
      %33 = sbr.rel (0) target = $region13
    $region12: #{tpu_custom_call.1} parent=1 // pred_region
      _
    $region13: #{tpu_custom_call.1} parent=1 // pred_fallthru
      _
    // Predicated region
    $region14: #{tpu_custom_call.1} parent=1 // pred_check
      _
    $region15: #{tpu_custom_call.1} parent=1 // pred_check_branch
      %35 = sbr.rel (0) target = $region17
    $region16: #{tpu_custom_call.1} parent=1 // pred_region
      _
    $region17: #{tpu_custom_call.1} parent=1 // pred_fallthru
      _
    // Predicated region
    $region18: #{tpu_custom_call.1} parent=1 // pred_check
      _
    $region19: #{tpu_custom_call.1} parent=1 // pred_check_branch
      %37 = sbr.rel (0) target = $region21
    $region20: #{tpu_custom_call.1} parent=1 // pred_region
      _
    $region21: #{tpu_custom_call.1} parent=1 // pred_fallthru
      _
    // Predicated region
    $region22: #{tpu_custom_call.1} parent=1 // pred_check
      _
    $region23: #{tpu_custom_call.1} parent=1 // pred_check_branch
      %39 = sbr.rel (0) target = $region25
    $region24: #{tpu_custom_call.1} parent=1 // pred_region
      _
    $region25: #{tpu_custom_call.1} parent=1 // pred_fallthru
      _
    // Predicated region
    $region26: #{tpu_custom_call.1} parent=1 // pred_check
      _
    $region27: #{tpu_custom_call.1} parent=1 // pred_check_branch
      %41 = sbr.rel (0) target = $region29
    $region28: #{tpu_custom_call.1} parent=1 // pred_region
      _
    $region29: #{tpu_custom_call.1} parent=1 // pred_fallthru
      _
    // Predicated region
    $region30: #{tpu_custom_call.1} parent=1 // pred_check
      _
    $region31: #{tpu_custom_call.1} parent=1 // pred_check_branch
      %43 = sbr.rel (0) target = $region33
    $region32: #{tpu_custom_call.1} parent=1 // pred_region
      _
    $region33: #{tpu_custom_call.1} parent=1 // pred_fallthru
      _
    // Predicated region
    $region34: #{tpu_custom_call.1} parent=1 // pred_check
      _
    $region35: #{tpu_custom_call.1} parent=1 // pred_check_branch
      %45 = sbr.rel (0) target = $region37
    $region36: #{tpu_custom_call.1} parent=1 // pred_region
      _
    $region37: #{tpu_custom_call.1} parent=1 // pred_fallthru
      _
    // Predicated region
    $region38: #{tpu_custom_call.1} parent=1 // pred_check
      _
    $region39: #{tpu_custom_call.1} parent=1 // pred_check_branch
      %47 = sbr.rel (0) target = $region41
    $region40: #{tpu_custom_call.1} parent=1 // pred_region
      _
    $region41: #{tpu_custom_call.1} parent=1 // pred_fallthru
      _
    // Predicated region
    $region42: #{tpu_custom_call.1} parent=1 // pred_check
      _
    $region43: #{tpu_custom_call.1} parent=1 // pred_check_branch
      %49 = sbr.rel (0) target = $region45
    $region44: #{tpu_custom_call.1} parent=1 // pred_region
      _
    $region45: #{tpu_custom_call.1} parent=1 // pred_fallthru
      _
    // Predicated region
    $region46: #{tpu_custom_call.1} parent=1 // pred_check
      _
    $region47: #{tpu_custom_call.1} parent=1 // pred_check_branch
      %51 = sbr.rel (0) target = $region49
    $region48: #{tpu_custom_call.1} parent=1 // pred_region
      _
    $region49: #{tpu_custom_call.1} parent=1 // pred_fallthru
      _
    // Predicated region
    $region50: #{tpu_custom_call.1} parent=1 // pred_check
      _
    $region51: #{tpu_custom_call.1} parent=1 // pred_check_branch
      %53 = sbr.rel (0) target = $region53
    $region52: #{tpu_custom_call.1} parent=1 // pred_region
      _
    $region53: #{tpu_custom_call.1} parent=1 // pred_fallthru
      _
    // Predicated region
    $region54: #{tpu_custom_call.1} parent=1 // pred_check
      _
    $region55: #{tpu_custom_call.1} parent=1 // pred_check_branch
      %55 = sbr.rel (0) target = $region57
    $region56: #{tpu_custom_call.1} parent=1 // pred_region
      _
    $region57: #{tpu_custom_call.1} parent=1 // pred_fallthru
      _
    // Predicated region
    $region58: #{tpu_custom_call.1} parent=1 // pred_check
      _
    $region59: #{tpu_custom_call.1} parent=1 // pred_check_branch
      %57 = sbr.rel (0) target = $region61
    $region60: #{tpu_custom_call.1} parent=1 // pred_region
      _
    $region61: #{tpu_custom_call.1} parent=1 // pred_fallthru
      _
    // Predicated region
    $region62: #{tpu_custom_call.1} parent=1 // pred_check
      _
    $region63: #{tpu_custom_call.1} parent=1 // pred_check_branch
      %59 = sbr.rel (0) target = $region65
    $region64: #{tpu_custom_call.1} parent=1 // pred_region
      _
    $region65: #{tpu_custom_call.1} parent=1 // pred_fallthru
      _
    // Predicated region
    $region66: #{tpu_custom_call.1} parent=1 // pred_check
      _
    $region67: #{tpu_custom_call.1} parent=1 // pred_check_branch
      %61 = sbr.rel (0) target = $region69
    $region68: #{tpu_custom_call.1} parent=1 // pred_region
      _
    $region69: #{tpu_custom_call.1} parent=1 // pred_fallthru
      _
    // Predicated region
    $region70: #{tpu_custom_call.1} parent=1 // pred_check
      _
    $region71: #{tpu_custom_call.1} parent=1 // pred_check_branch
      %63 = sbr.rel (0) target = $region73
    $region72: #{tpu_custom_call.1} parent=1 // pred_region
      _
    $region73: #{tpu_custom_call.1} parent=1 // pred_fallthru
      _
    // Predicated region
    $region74: #{tpu_custom_call.1} parent=1 // pred_check
      _
    $region75: #{tpu_custom_call.1} parent=1 // pred_check_branch
      %65 = sbr.rel (0) target = $region77
    $region76: #{tpu_custom_call.1} parent=1 // pred_region
      _
    $region77: #{tpu_custom_call.1} parent=1 // pred_fallthru
      _
    %v67 = vld [vmem:[%s0] sm:$0xff]
    %v68 = vld [vmem:[%s0 + $0x8] sm:$0xff]
    %v69 = vpack.c.bf16 %v68, %v67
    %v70 = vld [vmem:[%s4] sm:$0xf]
    %v71 = vld [vmem:[%s4 + $0x4] sm:$0xf]
    %v72 = vld [vmem:[%s4 + $0x8] sm:$0xf]
    %v73 = vld [vmem:[%s5] sm:$0x1]
    %v75 = vlaneseq
    %v76 = vshrl.u32 %v75, 7
    %v77 = vsub.s32 0, %v76
    %v78 = vrot.slane %v73, %v77
    %v83 = vunpack.c.l.b16 %v70
    %v84 = vunpack.c.l.b16 %v71
    %v85 = vunpack.c.l.b16 %v72
    %v86 = vpack.c.b16 %v84, %v83
    %v87 = vpack.c.b16 %v85, %v85
    %vm89 = vcmask 195584
    %v91 = vsel %vm89, %v69, 0
    %vm93 = vcmask 1043456
    %v95 = vsel %vm93, %v87, 0
    %97 = vmatprep.subr.bf16.mxu0 0
    %98 = vmatpush1.bf16.msra.mxu0 %v86
    %99 = vmatprep.subr.bf16.mxu0 0
    %100 = vmatpush1.bf16.msra.mxu0 %v95
    %101 = vmatprep.subr.bf16.mxu0 0
    %102 = vmatpush1.bf16.msra.mxu0 0
    %103 = vmatprep.subr.bf16.mxu0 0
    %104 = vmatpush1.bf16.msra.mxu0 0
    %105 = vmatprep.subr.bf16.mxu0 0
    %106 = vmatpush1.bf16.msra.mxu0 0
    %107 = vmatprep.subr.bf16.mxu0 0
    %108 = vmatpush1.bf16.msra.mxu0 0
    %109 = vmatprep.subr.bf16.mxu0 0
    %110 = vmatpush1.bf16.msra.mxu0 0
    %111 = vmatprep.subr.bf16.mxu0 0
    %112 = vmatpush1.bf16.msra.mxu0 0
    %113 = vmatprep.subr.bf16.mxu0 0
    %114 = vmatpush1.bf16.msra.mxu0 0
    %115 = vmatprep.subr.bf16.mxu0 0
    %116 = vmatpush1.bf16.msra.mxu0 0
    %117 = vmatprep.subr.bf16.mxu0 0
    %118 = vmatpush1.bf16.msra.mxu0 0
    %119 = vmatprep.subr.bf16.mxu0 0
    %120 = vmatpush1.bf16.msra.mxu0 0
    %121 = vmatprep.subr.bf16.mxu0 0
    %122 = vmatpush1.bf16.msra.mxu0 0
    %123 = vmatprep.subr.bf16.mxu0 0
    %124 = vmatpush1.bf16.msra.mxu0 0
    %125 = vmatprep.subr.bf16.mxu0 0
    %126 = vmatpush1.bf16.msra.mxu0 0
    %127 = vmatprep.subr.bf16.mxu0 0
    %128 = vmatpush1.bf16.msra.mxu0 0
    %129 = vmatprep.mubr.bf16.mxu0 0
    %130 = vmatmul.mubr.bf16.gmra.mrb[0].mxu0 %v91
    %v131 = vpop.f32.mrb[0].mxu0
    %v132 = vadd.f32 %v78, %v131
    %v133 = vpop.f32.mrb[0].mxu0
    %v134 = vpop.f32.mrb[0].mxu0
    %v135 = vadd.f32 %v78, %v134
    %v136 = vpop.f32.mrb[0].mxu0
    %137 = vdwg.mxu0
    %v138 = vld [vmem:[%s2] sm:$0xff]
    %v139 = vld [vmem:[%s2 + $0x8] sm:$0xff]
    %v140 = vmul.f32 %v132, %v138
    %v141 = vmul.f32 %v135, %v139
    %v142 = vld [vmem:[%s1] sm:$0xff]
    %v143 = vld [vmem:[%s1 + $0x8] sm:$0xff]
    %v144 = vadd.f32 %v140, %v142
    %v145 = vadd.f32 %v141, %v143
    %vm146 = vcmask 261120
    %v147 = vsel %vm146, %v144, 0.0
    %v148 = vsel %vm146, %v145, 0.0
    %149 = vst [vmem:[#allocation4] sm:$0xff] %v147
    %150 = vst [vmem:[#allocation4 + $0x8] sm:$0xff] %v148
    %v151 = vld [vmem:[%s3] sm:$0xff]
    %v152 = vld [vmem:[%s3 + $0x8] sm:$0xff]
    %vm153 = vcmp.ne.f32.partialorder %v151, 0.0
    %vm154 = vcmp.ne.f32.partialorder %v152, 0.0
    %v155 = vpack.c.bf16 %v145, %v144
    %v156 = vld [vmem:[%s6] sm:$0xff]
    %v157 = vld [vmem:[%s6 + $0x8] sm:$0xff]
    %v158 = vld [vmem:[%s6 + $0x10] sm:$0xff]
    %v159 = vld [vmem:[%s6 + $0x18] sm:$0xff]
    %v164 = vunpack.c.l.b16 %v156
    %v165 = vunpack.c.h.b16 %v156
    %v166 = vunpack.c.l.b16 %v157
    %v167 = vunpack.c.h.b16 %v157
    %v168 = vunpack.c.l.b16 %v158
    %v169 = vunpack.c.h.b16 %v158
    %v170 = vunpack.c.l.b16 %v159
    %v171 = vunpack.c.h.b16 %v159
    %v172 = vpack.c.b16 %v166, %v164
    %v173 = vpack.c.b16 %v167, %v165
    %v174 = vpack.c.b16 %v170, %v168
    %v175 = vpack.c.b16 %v171, %v169
    %v181 = vsel %vm146, %v155, 0
    %183 = vmatprep.subr.bf16.mxu0 %v173
    %184 = vmatpush1.bf16.msra.mxu0 %v172
    %185 = vmatprep.subr.bf16.mxu0 %v175
    %186 = vmatpush1.bf16.msra.mxu0 %v174
    %187 = vmatprep.subr.bf16.mxu0 0
    %188 = vmatpush1.bf16.msra.mxu0 0
    %189 = vmatprep.subr.bf16.mxu0 0
    %190 = vmatpush1.bf16.msra.mxu0 0
    %191 = vmatprep.subr.bf16.mxu0 0
    %192 = vmatpush1.bf16.msra.mxu0 0
    %193 = vmatprep.subr.bf16.mxu0 0
    %194 = vmatpush1.bf16.msra.mxu0 0
    %195 = vmatprep.subr.bf16.mxu0 0
    %196 = vmatpush1.bf16.msra.mxu0 0
    %197 = vmatprep.subr.bf16.mxu0 0
    %198 = vmatpush1.bf16.msra.mxu0 0
    %199 = vmatprep.subr.bf16.mxu0 0
    %200 = vmatpush1.bf16.msra.mxu0 0
    %201 = vmatprep.subr.bf16.mxu0 0
    %202 = vmatpush1.bf16.msra.mxu0 0
    %203 = vmatprep.subr.bf16.mxu0 0
    %204 = vmatpush1.bf16.msra.mxu0 0
    %205 = vmatprep.subr.bf16.mxu0 0
    %206 = vmatpush1.bf16.msra.mxu0 0
    %207 = vmatprep.subr.bf16.mxu0 0
    %208 = vmatpush1.bf16.msra.mxu0 0
    %209 = vmatprep.subr.bf16.mxu0 0
    %210 = vmatpush1.bf16.msra.mxu0 0
    %211 = vmatprep.subr.bf16.mxu0 0
    %212 = vmatpush1.bf16.msra.mxu0 0
    %213 = vmatprep.subr.bf16.mxu0 0
    %214 = vmatpush1.bf16.msra.mxu0 0
    %215 = vmatprep.mubr.bf16.mxu0 0
    %216 = vmatmul.mubr.bf16.gmra.mrb[0].mxu0 %v181
    %v217 = vpop.f32.mrb[0].mxu0
    %v218 = vadd.f32 0.0, %v217
    %v219 = vpop.f32.mrb[0].mxu0
    %v220 = vadd.f32 0.0, %v219
    %v221 = vpop.f32.mrb[0].mxu0
    %v222 = vadd.f32 0.0, %v221
    %v223 = vpop.f32.mrb[0].mxu0
    %v224 = vadd.f32 0.0, %v223
    %225 = vdwg.mxu0
    %v226 = vmul.f32 %v218, 0.4204482
    %v227 = vmul.f32 %v222, 0.4204482
    %v228 = vpack.c.bf16 %v227, %v226
    %230 = vrot.lane.b32.xlu0 %v228, 64
    %v231 = vpop.permute.xlu0 %230
    %v233 = vsel %vm146, %v228, 0
    %v236 = vsel %vm146, %v231, 0
    %238 = vmatprep.subr.bf16.mxu0 0
    %239 = vmatpush1.bf16.xpose.msra.mxu0 %v236
    %240 = vmatprep.subr.bf16.mxu0 0
    %241 = vmatpush1.bf16.xpose.msra.mxu0 0
    %242 = vmatprep.subr.bf16.mxu0 0
    %243 = vmatpush1.bf16.xpose.msra.mxu0 0
    %244 = vmatprep.subr.bf16.mxu0 0
    %245 = vmatpush1.bf16.xpose.msra.mxu0 0
    %246 = vmatprep.subr.bf16.mxu0 0
    %247 = vmatpush1.bf16.xpose.msra.mxu0 0
    %248 = vmatprep.subr.bf16.mxu0 0
    %249 = vmatpush1.bf16.xpose.msra.mxu0 0
    %250 = vmatprep.subr.bf16.mxu0 0
    %251 = vmatpush1.bf16.xpose.msra.mxu0 0
    %252 = vmatprep.subr.bf16.mxu0 0
    %253 = vmatpush1.bf16.xpose.msra.mxu0 0
    %254 = vmatprep.subr.bf16.mxu0 0
    %255 = vmatpush1.bf16.xpose.msra.mxu0 0
    %256 = vmatprep.subr.bf16.mxu0 0
    %257 = vmatpush1.bf16.xpose.msra.mxu0 0
    %258 = vmatprep.subr.bf16.mxu0 0
    %259 = vmatpush1.bf16.xpose.msra.mxu0 0
    %260 = vmatprep.subr.bf16.mxu0 0
    %261 = vmatpush1.bf16.xpose.msra.mxu0 0
    %262 = vmatprep.subr.bf16.mxu0 0
    %263 = vmatpush1.bf16.xpose.msra.mxu0 0
    %264 = vmatprep.subr.bf16.mxu0 0
    %265 = vmatpush1.bf16.xpose.msra.mxu0 0
    %266 = vmatprep.subr.bf16.mxu0 0
    %267 = vmatpush1.bf16.xpose.msra.mxu0 0
    %268 = vmatprep.subr.bf16.mxu0 0
    %269 = vmatpush1.bf16.xpose.msra.mxu0 0
    %270 = vmatprep.mubr.bf16.mxu0 0
    %271 = vmatmul.mubr.bf16.gmra.mrb[0].mxu0 %v233
    %v272 = vpop.f32.mrb[0].mxu0
    %v273 = vadd.f32 0.0, %v272
    %v274 = vpop.f32.mrb[0].mxu0
    %v275 = vpop.f32.mrb[0].mxu0
    %v276 = vadd.f32 0.0, %v275
    %v277 = vpop.f32.mrb[0].mxu0
    %278 = vdwg.mxu0
    %v279 = vsel %vm153, %v273, -1e+09
    %v280 = vsel %vm154, %v276, -1e+09
    %vm281 = vcmask 130048
    %v282 = vsel %vm281, %v279, -inf
    %283 = vmax.xlane.f32.xlu0 %v282
    %v284 = vpop.xlane.xlu0 %283
    %v285 = vsel %vm281, %v280, -inf
    %286 = vmax.xlane.f32.xlu0 %v285
    %v287 = vpop.xlane.xlu0 %286
    %v288 = vsub.f32 %v279, %v284
    %v289 = vsub.f32 %v280, %v287
    %v290 = vmul.f32 %v288, 1.442695
    %v291 = vpow.pop %v290
    %v292 = vmul.f32 %v289, 1.442695
    %v293 = vpow.pop %v292
    %v294 = vsel %vm281, %v291, 0.0
    %295 = vadd.xlane.f32.xlu0 %v294
    %v296 = vpop.xlane.xlu0 %295
    %v297 = vsel %vm281, %v293, 0.0
    %298 = vadd.xlane.f32.xlu0 %v297
    %v299 = vpop.xlane.xlu0 %298
    %v300 = vrcp.pop %v296
    %v301 = vmul.f32 %v291, %v300
    %v302 = vrcp.pop %v299
    %v303 = vmul.f32 %v293, %v302
    %v304 = vpack.c.bf16 %v303, %v301
    %v305 = vpack.c.bf16 %v224, %v220
    %v307 = vsel %vm281, %v304, 0
    %309 = vmatprep.subr.bf16.mxu0 0
    %310 = vmatpush1.bf16.msra.mxu0 %v305
    %311 = vmatprep.subr.bf16.mxu0 0
    %312 = vmatpush1.bf16.msra.mxu0 0
    %313 = vmatprep.subr.bf16.mxu0 0
    %314 = vmatpush1.bf16.msra.mxu0 0
    %315 = vmatprep.subr.bf16.mxu0 0
    %316 = vmatpush1.bf16.msra.mxu0 0
    %317 = vmatprep.subr.bf16.mxu0 0
    %318 = vmatpush1.bf16.msra.mxu0 0
    %319 = vmatprep.subr.bf16.mxu0 0
    %320 = vmatpush1.bf16.msra.mxu0 0
    %321 = vmatprep.subr.bf16.mxu0 0
    %322 = vmatpush1.bf16.msra.mxu0 0
    %323 = vmatprep.subr.bf16.mxu0 0
    %324 = vmatpush1.bf16.msra.mxu0 0
    %325 = vmatprep.subr.bf16.mxu0 0
    %326 = vmatpush1.bf16.msra.mxu0 0
    %327 = vmatprep.subr.bf16.mxu0 0
    %328 = vmatpush1.bf16.msra.mxu0 0
    %329 = vmatprep.subr.bf16.mxu0 0
    %330 = vmatpush1.bf16.msra.mxu0 0
    %331 = vmatprep.subr.bf16.mxu0 0
    %332 = vmatpush1.bf16.msra.mxu0 0
    %333 = vmatprep.subr.bf16.mxu0 0
    %334 = vmatpush1.bf16.msra.mxu0 0
    %335 = vmatprep.subr.bf16.mxu0 0
    %336 = vmatpush1.bf16.msra.mxu0 0
    %337 = vmatprep.subr.bf16.mxu0 0
    %338 = vmatpush1.bf16.msra.mxu0 0
    %339 = vmatprep.subr.bf16.mxu0 0
    %340 = vmatpush1.bf16.msra.mxu0 0
    %341 = vmatprep.mubr.bf16.mxu0 0
    %342 = vmatmul.mubr.bf16.gmra.mrb[0].mxu0 %v307
    %v343 = vpop.f32.mrb[0].mxu0
    %v344 = vadd.f32 0.0, %v343
    %v345 = vpop.f32.mrb[0].mxu0
    %v346 = vpop.f32.mrb[0].mxu0
    %v347 = vadd.f32 0.0, %v346
    %v348 = vpop.f32.mrb[0].mxu0
    %349 = vdwg.mxu0
    %350 = vrot.lane.b32.xlu0 %v228, 96
    %v351 = vpop.permute.xlu0 %350
    %352 = vrot.lane.b32.xlu0 %v228, 32
    %v353 = vpop.permute.xlu0 %352
    %v355 = vsel %vm146, %v351, 0
    %v358 = vsel %vm146, %v353, 0
    %360 = vmatprep.subr.bf16.mxu0 0
    %361 = vmatpush1.bf16.xpose.msra.mxu0 %v358
    %362 = vmatprep.subr.bf16.mxu0 0
    %363 = vmatpush1.bf16.xpose.msra.mxu0 0
    %364 = vmatprep.subr.bf16.mxu0 0
    %365 = vmatpush1.bf16.xpose.msra.mxu0 0
    %366 = vmatprep.subr.bf16.mxu0 0
    %367 = vmatpush1.bf16.xpose.msra.mxu0 0
    %368 = vmatprep.subr.bf16.mxu0 0
    %369 = vmatpush1.bf16.xpose.msra.mxu0 0
    %370 = vmatprep.subr.bf16.mxu0 0
    %371 = vmatpush1.bf16.xpose.msra.mxu0 0
    %372 = vmatprep.subr.bf16.mxu0 0
    %373 = vmatpush1.bf16.xpose.msra.mxu0 0
    %374 = vmatprep.subr.bf16.mxu0 0
    %375 = vmatpush1.bf16.xpose.msra.mxu0 0
    %376 = vmatprep.subr.bf16.mxu0 0
    %377 = vmatpush1.bf16.xpose.msra.mxu0 0
    %378 = vmatprep.subr.bf16.mxu0 0
    %379 = vmatpush1.bf16.xpose.msra.mxu0 0
    %380 = vmatprep.subr.bf16.mxu0 0
    %381 = vmatpush1.bf16.xpose.msra.mxu0 0
    %382 = vmatprep.subr.bf16.mxu0 0
    %383 = vmatpush1.bf16.xpose.msra.mxu0 0
    %384 = vmatprep.subr.bf16.mxu0 0
    %385 = vmatpush1.bf16.xpose.msra.mxu0 0
    %386 = vmatprep.subr.bf16.mxu0 0
    %387 = vmatpush1.bf16.xpose.msra.mxu0 0
    %388 = vmatprep.subr.bf16.mxu0 0
    %389 = vmatpush1.bf16.xpose.msra.mxu0 0
    %390 = vmatprep.subr.bf16.mxu0 0
    %391 = vmatpush1.bf16.xpose.msra.mxu0 0
    %392 = vmatprep.mubr.bf16.mxu0 0
    %393 = vmatmul.mubr.bf16.gmra.mrb[0].mxu0 %v355
    %v394 = vpop.f32.mrb[0].mxu0
    %v395 = vadd.f32 0.0, %v394
    %v396 = vpop.f32.mrb[0].mxu0
    %v397 = vpop.f32.mrb[0].mxu0
    %v398 = vadd.f32 0.0, %v397
    %v399 = vpop.f32.mrb[0].mxu0
    %400 = vdwg.mxu0
    %v401 = vsel %vm153, %v395, -1e+09
    %v402 = vsel %vm154, %v398, -1e+09
    %v403 = vsel %vm281, %v401, -inf
    %404 = vmax.xlane.f32.xlu0 %v403
    %v405 = vpop.xlane.xlu0 %404
    %v406 = vsel %vm281, %v402, -inf
    %407 = vmax.xlane.f32.xlu0 %v406
    %v408 = vpop.xlane.xlu0 %407
    %v409 = vsub.f32 %v401, %v405
    %v410 = vsub.f32 %v402, %v408
    %v411 = vmul.f32 %v409, 1.442695
    %v412 = vpow.pop %v411
    %v413 = vmul.f32 %v410, 1.442695
    %v414 = vpow.pop %v413
    %v415 = vsel %vm281, %v412, 0.0
    %416 = vadd.xlane.f32.xlu0 %v415
    %v417 = vpop.xlane.xlu0 %416
    %v418 = vsel %vm281, %v414, 0.0
    %419 = vadd.xlane.f32.xlu0 %v418
    %v420 = vpop.xlane.xlu0 %419
    %v421 = vrcp.pop %v417
    %v422 = vmul.f32 %v412, %v421
    %v423 = vrcp.pop %v420
    %v424 = vmul.f32 %v414, %v423
    %v425 = vpack.c.bf16 %v424, %v422
    %427 = vrot.lane.b32.xlu0 %v305, 96
    %v428 = vpop.permute.xlu0 %427
    %v431 = vsel %vm281, %v425, 0
    %433 = vmatprep.subr.bf16.mxu0 0
    %434 = vmatpush1.bf16.msra.mxu0 %v428
    %435 = vmatprep.subr.bf16.mxu0 0
    %436 = vmatpush1.bf16.msra.mxu0 0
    %437 = vmatprep.subr.bf16.mxu0 0
    %438 = vmatpush1.bf16.msra.mxu0 0
    %439 = vmatprep.subr.bf16.mxu0 0
    %440 = vmatpush1.bf16.msra.mxu0 0
    %441 = vmatprep.subr.bf16.mxu0 0
    %442 = vmatpush1.bf16.msra.mxu0 0
    %443 = vmatprep.subr.bf16.mxu0 0
    %444 = vmatpush1.bf16.msra.mxu0 0
    %445 = vmatprep.subr.bf16.mxu0 0
    %446 = vmatpush1.bf16.msra.mxu0 0
    %447 = vmatprep.subr.bf16.mxu0 0
    %448 = vmatpush1.bf16.msra.mxu0 0
    %449 = vmatprep.subr.bf16.mxu0 0
    %450 = vmatpush1.bf16.msra.mxu0 0
    %451 = vmatprep.subr.bf16.mxu0 0
    %452 = vmatpush1.bf16.msra.mxu0 0
    %453 = vmatprep.subr.bf16.mxu0 0
    %454 = vmatpush1.bf16.msra.mxu0 0
    %455 = vmatprep.subr.bf16.mxu0 0
    %456 = vmatpush1.bf16.msra.mxu0 0
    %457 = vmatprep.subr.bf16.mxu0 0
    %458 = vmatpush1.bf16.msra.mxu0 0
    %459 = vmatprep.subr.bf16.mxu0 0
    %460 = vmatpush1.bf16.msra.mxu0 0
    %461 = vmatprep.subr.bf16.mxu0 0
    %462 = vmatpush1.bf16.msra.mxu0 0
    %463 = vmatprep.subr.bf16.mxu0 0
    %464 = vmatpush1.bf16.msra.mxu0 0
    %465 = vmatprep.mubr.bf16.mxu0 0
    %466 = vmatmul.mubr.bf16.gmra.mrb[0].mxu0 %v431
    %v467 = vpop.f32.mrb[0].mxu0
    %v468 = vadd.f32 0.0, %v467
    %v469 = vpop.f32.mrb[0].mxu0
    %v470 = vpop.f32.mrb[0].mxu0
    %v471 = vadd.f32 0.0, %v470
    %v472 = vpop.f32.mrb[0].mxu0
    %473 = vdwg.mxu0
    %476 = vrot.lane.b32.xlu0 %v468, 32
    %v477 = vpop.permute.xlu0 %476
    %478 = vrot.lane.b32.xlu0 %v471, 32
    %v479 = vpop.permute.xlu0 %478
    %v482 = vsel %vm146, %v344, %v477
    %v483 = vsel %vm146, %v347, %v479
    %v484 = vpack.c.bf16 %v483, %v482
    %v485 = vld [vmem:[%s7] sm:$0xf]
    %v486 = vld [vmem:[%s7 + $0x4] sm:$0xf]
    %v487 = vld [vmem:[%s7 + $0x8] sm:$0xf]
    %v488 = vld [vmem:[%s7 + $0xc] sm:$0xf]
    %v489 = vld [vmem:[%s7 + $0x10] sm:$0xf]
    %v490 = vld [vmem:[%s7 + $0x14] sm:$0xf]
    %v491 = vld [vmem:[%s7 + $0x18] sm:$0xf]
    %v492 = vld [vmem:[%s7 + $0x1c] sm:$0xf]
    %v493 = vld [vmem:[%s8] sm:$0x1]
    %v495 = vlaneseq
    %v496 = vshrl.u32 %v495, 7
    %v497 = vsub.s32 0, %v496
    %v498 = vrot.slane %v493, %v497
    %v508 = vunpack.c.l.b16 %v485
    %v509 = vunpack.c.l.b16 %v486
    %v510 = vunpack.c.l.b16 %v487
    %v511 = vunpack.c.l.b16 %v488
    %v512 = vunpack.c.l.b16 %v489
    %v513 = vunpack.c.l.b16 %v490
    %v514 = vunpack.c.l.b16 %v491
    %v515 = vunpack.c.l.b16 %v492
    %v516 = vpack.c.b16 %v509, %v508
    %v517 = vpack.c.b16 %v511, %v510
    %v518 = vpack.c.b16 %v513, %v512
    %v519 = vpack.c.b16 %v515, %v514
    %vm524 = vcmask 523264
    %v526 = vsel %vm524, %v484, 0
    %528 = vmatprep.subr.bf16.mxu0 0
    %529 = vmatpush1.bf16.msra.mxu0 %v516
    %530 = vmatprep.subr.bf16.mxu0 0
    %531 = vmatpush1.bf16.msra.mxu0 %v517
    %532 = vmatprep.subr.bf16.mxu0 0
    %533 = vmatpush1.bf16.msra.mxu0 %v518
    %534 = vmatprep.subr.bf16.mxu0 0
    %535 = vmatpush1.bf16.msra.mxu0 %v519
    %536 = vmatprep.subr.bf16.mxu0 0
    %537 = vmatpush1.bf16.msra.mxu0 0
    %538 = vmatprep.subr.bf16.mxu0 0
    %539 = vmatpush1.bf16.msra.mxu0 0
    %540 = vmatprep.subr.bf16.mxu0 0
    %541 = vmatpush1.bf16.msra.mxu0 0
    %542 = vmatprep.subr.bf16.mxu0 0
    %543 = vmatpush1.bf16.msra.mxu0 0
    %544 = vmatprep.subr.bf16.mxu0 0
    %545 = vmatpush1.bf16.msra.mxu0 0
    %546 = vmatprep.subr.bf16.mxu0 0
    %547 = vmatpush1.bf16.msra.mxu0 0
    %548 = vmatprep.subr.bf16.mxu0 0
    %549 = vmatpush1.bf16.msra.mxu0 0
    %550 = vmatprep.subr.bf16.mxu0 0
    %551 = vmatpush1.bf16.msra.mxu0 0
    %552 = vmatprep.subr.bf16.mxu0 0
    %553 = vmatpush1.bf16.msra.mxu0 0
    %554 = vmatprep.subr.bf16.mxu0 0
    %555 = vmatpush1.bf16.msra.mxu0 0
    %556 = vmatprep.subr.bf16.mxu0 0
    %557 = vmatpush1.bf16.msra.mxu0 0
    %558 = vmatprep.subr.bf16.mxu0 0
    %559 = vmatpush1.bf16.msra.mxu0 0
    %560 = vmatprep.mubr.bf16.mxu0 0
    %561 = vmatmul.mubr.bf16.gmra.mrb[0].mxu0 %v526
    %v562 = vpop.f32.mrb[0].mxu0
    %v563 = vadd.f32 %v498, %v562
    %v564 = vpop.f32.mrb[0].mxu0
    %v565 = vpop.f32.mrb[0].mxu0
    %v566 = vadd.f32 %v498, %v565
    %v567 = vpop.f32.mrb[0].mxu0
    %568 = vdwg.mxu0
    %v569 = vadd.f32 %v563, %v144
    %v570 = vadd.f32 %v566, %v145
    %v571 = vld [vmem:[%s9] sm:$0x1]
    %v572 = vld [vmem:[%s10] sm:$0x1]
    %v573 = vsel %vm146, %v569, 0.0
    %574 = vadd.xlane.f32.xlu0 %v573
    %v575 = vpop.xlane.xlu0 %574
    %v576 = vsel %vm146, %v570, 0.0
    %577 = vadd.xlane.f32.xlu0 %v576
    %v578 = vpop.xlane.xlu0 %577
    %v579 = vrcp.pop 32.0
    %v580 = vmul.f32 %v575, %v579
    %v581 = vmul.f32 %v578, %v579
    %v582 = vsub.f32 %v569, %v580
    %v583 = vsub.f32 %v570, %v581
    %v584 = vmul.f32 %v582, %v582
    %v585 = vmul.f32 %v583, %v583
    %v586 = vsel %vm146, %v584, 0.0
    %587 = vadd.xlane.f32.xlu0 %v586
    %v588 = vpop.xlane.xlu0 %587
    %v589 = vsel %vm146, %v585, 0.0
    %590 = vadd.xlane.f32.xlu0 %v589
    %v591 = vpop.xlane.xlu0 %590
    %v592 = vmul.f32 %v588, %v579
    %v593 = vmul.f32 %v591, %v579
    %v594 = vadd.f32 %v592, 1e-05
    %v595 = vadd.f32 %v593, 1e-05
    %v596 = vrsqrt.pop %v594
    %v597 = vrsqrt.pop %v595
    %v598 = vmul.f32 %v582, %v596
    %v599 = vmul.f32 %v583, %v597
    %v601 = vlaneseq
    %v602 = vshrl.u32 %v601, 7
    %v603 = vsub.s32 0, %v602
    %v604 = vrot.slane %v571, %v603
    %v606 = vmul.f32 %v598, %v604
    %v607 = vmul.f32 %v599, %v604
    %v609 = vlaneseq
    %v610 = vshrl.u32 %v609, 7
    %v611 = vsub.s32 0, %v610
    %v612 = vrot.slane %v572, %v611
    %v614 = vadd.f32 %v606, %v612
    %v615 = vadd.f32 %v607, %v612
    %v616 = vpack.c.bf16 %v615, %v614
    %v617 = vld [vmem:[%s13] sm:$0xf]
    %v618 = vld [vmem:[%s13 + $0x4] sm:$0xf]
    %v619 = vld [vmem:[%s13 + $0x8] sm:$0xf]
    %v620 = vld [vmem:[%s13 + $0xc] sm:$0xf]
    %v621 = vld [vmem:[%s14] sm:$0x1]
    %v623 = vlaneseq
    %v624 = vshrl.u32 %v623, 7
    %v625 = vsub.s32 0, %v624
    %v626 = vrot.slane %v621, %v625
    %v632 = vunpack.c.l.b16 %v617
    %v633 = vunpack.c.l.b16 %v618
    %v634 = vunpack.c.l.b16 %v619
    %v635 = vunpack.c.l.b16 %v620
    %v636 = vpack.c.b16 %v633, %v632
    %v637 = vpack.c.b16 %v635, %v634
    %v641 = vsel %vm146, %v616, 0
    %643 = vmatprep.subr.bf16.mxu0 0
    %644 = vmatpush1.bf16.msra.mxu0 %v636
    %645 = vmatprep.subr.bf16.mxu0 0
    %646 = vmatpush1.bf16.msra.mxu0 %v637
    %647 = vmatprep.subr.bf16.mxu0 0
    %648 = vmatpush1.bf16.msra.mxu0 0
    %649 = vmatprep.subr.bf16.mxu0 0
    %650 = vmatpush1.bf16.msra.mxu0 0
    %651 = vmatprep.subr.bf16.mxu0 0
    %652 = vmatpush1.bf16.msra.mxu0 0
    %653 = vmatprep.subr.bf16.mxu0 0
    %654 = vmatpush1.bf16.msra.mxu0 0
    %655 = vmatprep.subr.bf16.mxu0 0
    %656 = vmatpush1.bf16.msra.mxu0 0
    %657 = vmatprep.subr.bf16.mxu0 0
    %658 = vmatpush1.bf16.msra.mxu0 0
    %659 = vmatprep.subr.bf16.mxu0 0
    %660 = vmatpush1.bf16.msra.mxu0 0
    %661 = vmatprep.subr.bf16.mxu0 0
    %662 = vmatpush1.bf16.msra.mxu0 0
    %663 = vmatprep.subr.bf16.mxu0 0
    %664 = vmatpush1.bf16.msra.mxu0 0
    %665 = vmatprep.subr.bf16.mxu0 0
    %666 = vmatpush1.bf16.msra.mxu0 0
    %667 = vmatprep.subr.bf16.mxu0 0
    %668 = vmatpush1.bf16.msra.mxu0 0
    %669 = vmatprep.subr.bf16.mxu0 0
    %670 = vmatpush1.bf16.msra.mxu0 0
    %671 = vmatprep.subr.bf16.mxu0 0
    %672 = vmatpush1.bf16.msra.mxu0 0
    %673 = vmatprep.subr.bf16.mxu0 0
    %674 = vmatpush1.bf16.msra.mxu0 0
    %675 = vmatprep.mubr.bf16.mxu0 0
    %676 = vmatmul.mubr.bf16.gmra.mrb[0].mxu0 %v641
    %v677 = vpop.f32.mrb[0].mxu0
    %v678 = vadd.f32 %v626, %v677
    %v679 = vpop.f32.mrb[0].mxu0
    %v680 = vpop.f32.mrb[0].mxu0
    %v681 = vadd.f32 %v626, %v680
    %v682 = vpop.f32.mrb[0].mxu0
    %683 = vdwg.mxu0
    %v684 = vmax.f32 %v678, 0.0
    %v685 = vmax.f32 %v681, 0.0
    %v686 = vpack.c.bf16 %v685, %v684
    %v687 = vld [vmem:[%s15] sm:$0xf]
    %v688 = vld [vmem:[%s15 + $0x4] sm:$0xf]
    %v689 = vld [vmem:[%s15 + $0x8] sm:$0xf]
    %v690 = vld [vmem:[%s15 + $0xc] sm:$0xf]
    %v691 = vld [vmem:[%s15 + $0x10] sm:$0xf]
    %v692 = vld [vmem:[%s15 + $0x14] sm:$0xf]
    %v693 = vld [vmem:[%s15 + $0x18] sm:$0xf]
    %v694 = vld [vmem:[%s15 + $0x1c] sm:$0xf]
    %v695 = vld [vmem:[%s15 + $0x20] sm:$0xf]
    %v696 = vld [vmem:[%s15 + $0x24] sm:$0xf]
    %v697 = vld [vmem:[%s15 + $0x28] sm:$0xf]
    %v698 = vld [vmem:[%s15 + $0x2c] sm:$0xf]
    %v699 = vld [vmem:[%s15 + $0x30] sm:$0xf]
    %v700 = vld [vmem:[%s15 + $0x34] sm:$0xf]
    %v701 = vld [vmem:[%s15 + $0x38] sm:$0xf]
    %v702 = vld [vmem:[%s15 + $0x3c] sm:$0xf]
    %v703 = vld [vmem:[%s16] sm:$0x1]
    %v705 = vlaneseq
    %v706 = vshrl.u32 %v705, 7
    %v707 = vsub.s32 0, %v706
    %v708 = vrot.slane %v703, %v707
    %v726 = vunpack.c.l.b16 %v687
    %v727 = vunpack.c.l.b16 %v688
    %v728 = vunpack.c.l.b16 %v689
    %v729 = vunpack.c.l.b16 %v690
    %v730 = vunpack.c.l.b16 %v691
    %v731 = vunpack.c.l.b16 %v692
    %v732 = vunpack.c.l.b16 %v693
    %v733 = vunpack.c.l.b16 %v694
    %v734 = vunpack.c.l.b16 %v695
    %v735 = vunpack.c.l.b16 %v696
    %v736 = vunpack.c.l.b16 %v697
    %v737 = vunpack.c.l.b16 %v698
    %v738 = vunpack.c.l.b16 %v699
    %v739 = vunpack.c.l.b16 %v700
    %v740 = vunpack.c.l.b16 %v701
    %v741 = vunpack.c.l.b16 %v702
    %v742 = vpack.c.b16 %v727, %v726
    %v743 = vpack.c.b16 %v729, %v728
    %v744 = vpack.c.b16 %v731, %v730
    %v745 = vpack.c.b16 %v733, %v732
    %v746 = vpack.c.b16 %v735, %v734
    %v747 = vpack.c.b16 %v737, %v736
    %v748 = vpack.c.b16 %v739, %v738
    %v749 = vpack.c.b16 %v741, %v740
    %758 = vmatprep.subr.bf16.mxu0 0
    %759 = vmatpush1.bf16.msra.mxu0 %v742
    %760 = vmatprep.subr.bf16.mxu0 0
    %761 = vmatpush1.bf16.msra.mxu0 %v743
    %762 = vmatprep.subr.bf16.mxu0 0
    %763 = vmatpush1.bf16.msra.mxu0 %v744
    %764 = vmatprep.subr.bf16.mxu0 0
    %765 = vmatpush1.bf16.msra.mxu0 %v745
    %766 = vmatprep.subr.bf16.mxu0 0
    %767 = vmatpush1.bf16.msra.mxu0 %v746
    %768 = vmatprep.subr.bf16.mxu0 0
    %769 = vmatpush1.bf16.msra.mxu0 %v747
    %770 = vmatprep.subr.bf16.mxu0 0
    %771 = vmatpush1.bf16.msra.mxu0 %v748
    %772 = vmatprep.subr.bf16.mxu0 0
    %773 = vmatpush1.bf16.msra.mxu0 %v749
    %774 = vmatprep.subr.bf16.mxu0 0
    %775 = vmatpush1.bf16.msra.mxu0 0
    %776 = vmatprep.subr.bf16.mxu0 0
    %777 = vmatpush1.bf16.msra.mxu0 0
    %778 = vmatprep.subr.bf16.mxu0 0
    %779 = vmatpush1.bf16.msra.mxu0 0
    %780 = vmatprep.subr.bf16.mxu0 0
    %781 = vmatpush1.bf16.msra.mxu0 0
    %782 = vmatprep.subr.bf16.mxu0 0
    %783 = vmatpush1.bf16.msra.mxu0 0
    %784 = vmatprep.subr.bf16.mxu0 0
    %785 = vmatpush1.bf16.msra.mxu0 0
    %786 = vmatprep.subr.bf16.mxu0 0
    %787 = vmatpush1.bf16.msra.mxu0 0
    %788 = vmatprep.subr.bf16.mxu0 0
    %789 = vmatpush1.bf16.msra.mxu0 0
    %790 = vmatprep.mubr.bf16.mxu0 0
    %791 = vmatmul.mubr.bf16.gmra.mrb[0].mxu0 %v686
    %v792 = vpop.f32.mrb[0].mxu0
    %v793 = vadd.f32 %v708, %v792
    %v794 = vpop.f32.mrb[0].mxu0
    %v795 = vpop.f32.mrb[0].mxu0
    %v796 = vadd.f32 %v708, %v795
    %v797 = vpop.f32.mrb[0].mxu0
    %798 = vdwg.mxu0
    %v799 = vadd.f32 %v793, %v614
    %v800 = vadd.f32 %v796, %v615
    %v801 = vld [vmem:[%s11] sm:$0x1]
    %v802 = vld [vmem:[%s12] sm:$0x1]
    %v803 = vsel %vm146, %v799, 0.0
    %804 = vadd.xlane.f32.xlu0 %v803
    %v805 = vpop.xlane.xlu0 %804
    %v806 = vsel %vm146, %v800, 0.0
    %807 = vadd.xlane.f32.xlu0 %v806
    %v808 = vpop.xlane.xlu0 %807
    %v809 = vmul.f32 %v805, %v579
    %v810 = vmul.f32 %v808, %v579
    %v811 = vsub.f32 %v799, %v809
    %v812 = vsub.f32 %v800, %v810
    %v813 = vmul.f32 %v811, %v811
    %v814 = vmul.f32 %v812, %v812
    %v815 = vsel %vm146, %v813, 0.0
    %816 = vadd.xlane.f32.xlu0 %v815
    %v817 = vpop.xlane.xlu0 %816
    %v818 = vsel %vm146, %v814, 0.0
    %819 = vadd.xlane.f32.xlu0 %v818
    %v820 = vpop.xlane.xlu0 %819
    %v821 = vmul.f32 %v817, %v579
    %v822 = vmul.f32 %v820, %v579
    %v823 = vadd.f32 %v821, 1e-05
    %v824 = vadd.f32 %v822, 1e-05
    %v825 = vrsqrt.pop %v823
    %v826 = vrsqrt.pop %v824
    %v827 = vmul.f32 %v811, %v825
    %v828 = vmul.f32 %v812, %v826
    %v830 = vlaneseq
    %v831 = vshrl.u32 %v830, 7
    %v832 = vsub.s32 0, %v831
    %v833 = vrot.slane %v801, %v832
    %v835 = vmul.f32 %v827, %v833
    %v836 = vmul.f32 %v828, %v833
    %v838 = vlaneseq
    %v839 = vshrl.u32 %v838, 7
    %v840 = vsub.s32 0, %v839
    %v841 = vrot.slane %v802, %v840
    %v843 = vadd.f32 %v835, %v841
    %v844 = vadd.f32 %v836, %v841
    %v845 = vpack.c.bf16 %v844, %v843
    %s846 = scalar_lea.vmem %s6, 32
    %v847 = vld [vmem:[%s846] sm:$0xff]
    %v848 = vld [vmem:[%s846 + $0x8] sm:$0xff]
    %v849 = vld [vmem:[%s846 + $0x10] sm:$0xff]
    %v850 = vld [vmem:[%s846 + $0x18] sm:$0xff]
    %v855 = vunpack.c.l.b16 %v847
    %v856 = vunpack.c.h.b16 %v847
    %v857 = vunpack.c.l.b16 %v848
    %v858 = vunpack.c.h.b16 %v848
    %v859 = vunpack.c.l.b16 %v849
    %v860 = vunpack.c.h.b16 %v849
    %v861 = vunpack.c.l.b16 %v850
    %v862 = vunpack.c.h.b16 %v850
    %v863 = vpack.c.b16 %v857, %v855
    %v864 = vpack.c.b16 %v858, %v856
    %v865 = vpack.c.b16 %v861, %v859
    %v866 = vpack.c.b16 %v862, %v860
    %v872 = vsel %vm146, %v845, 0
    %874 = vmatprep.subr.bf16.mxu0 %v864
    %875 = vmatpush1.bf16.msra.mxu0 %v863
    %876 = vmatprep.subr.bf16.mxu0 %v866
    %877 = vmatpush1.bf16.msra.mxu0 %v865
    %878 = vmatprep.subr.bf16.mxu0 0
    %879 = vmatpush1.bf16.msra.mxu0 0
    %880 = vmatprep.subr.bf16.mxu0 0
    %881 = vmatpush1.bf16.msra.mxu0 0
    %882 = vmatprep.subr.bf16.mxu0 0
    %883 = vmatpush1.bf16.msra.mxu0 0
    %884 = vmatprep.subr.bf16.mxu0 0
    %885 = vmatpush1.bf16.msra.mxu0 0
    %886 = vmatprep.subr.bf16.mxu0 0
    %887 = vmatpush1.bf16.msra.mxu0 0
    %888 = vmatprep.subr.bf16.mxu0 0
    %889 = vmatpush1.bf16.msra.mxu0 0
    %890 = vmatprep.subr.bf16.mxu0 0
    %891 = vmatpush1.bf16.msra.mxu0 0
    %892 = vmatprep.subr.bf16.mxu0 0
    %893 = vmatpush1.bf16.msra.mxu0 0
    %894 = vmatprep.subr.bf16.mxu0 0
    %895 = vmatpush1.bf16.msra.mxu0 0
    %896 = vmatprep.subr.bf16.mxu0 0
    %897 = vmatpush1.bf16.msra.mxu0 0
    %898 = vmatprep.subr.bf16.mxu0 0
    %899 = vmatpush1.bf16.msra.mxu0 0
    %900 = vmatprep.subr.bf16.mxu0 0
    %901 = vmatpush1.bf16.msra.mxu0 0
    %902 = vmatprep.subr.bf16.mxu0 0
    %903 = vmatpush1.bf16.msra.mxu0 0
    %904 = vmatprep.subr.bf16.mxu0 0
    %905 = vmatpush1.bf16.msra.mxu0 0
    %906 = vmatprep.mubr.bf16.mxu0 0
    %907 = vmatmul.mubr.bf16.gmra.mrb[0].mxu0 %v872
    %v908 = vpop.f32.mrb[0].mxu0
    %v909 = vadd.f32 0.0, %v908
    %v910 = vpop.f32.mrb[0].mxu0
    %v911 = vadd.f32 0.0, %v910
    %v912 = vpop.f32.mrb[0].mxu0
    %v913 = vadd.f32 0.0, %v912
    %v914 = vpop.f32.mrb[0].mxu0
    %v915 = vadd.f32 0.0, %v914
    %916 = vdwg.mxu0
    %v917 = vmul.f32 %v909, 0.4204482
    %v918 = vmul.f32 %v913, 0.4204482
    %v919 = vpack.c.bf16 %v918, %v917
    %921 = vrot.lane.b32.xlu0 %v919, 64
    %v922 = vpop.permute.xlu0 %921
    %v924 = vsel %vm146, %v919, 0
    %v927 = vsel %vm146, %v922, 0
    %929 = vmatprep.subr.bf16.mxu0 0
    %930 = vmatpush1.bf16.xpose.msra.mxu0 %v927
    %931 = vmatprep.subr.bf16.mxu0 0
    %932 = vmatpush1.bf16.xpose.msra.mxu0 0
    %933 = vmatprep.subr.bf16.mxu0 0
    %934 = vmatpush1.bf16.xpose.msra.mxu0 0
    %935 = vmatprep.subr.bf16.mxu0 0
    %936 = vmatpush1.bf16.xpose.msra.mxu0 0
    %937 = vmatprep.subr.bf16.mxu0 0
    %938 = vmatpush1.bf16.xpose.msra.mxu0 0
    %939 = vmatprep.subr.bf16.mxu0 0
    %940 = vmatpush1.bf16.xpose.msra.mxu0 0
    %941 = vmatprep.subr.bf16.mxu0 0
    %942 = vmatpush1.bf16.xpose.msra.mxu0 0
    %943 = vmatprep.subr.bf16.mxu0 0
    %944 = vmatpush1.bf16.xpose.msra.mxu0 0
    %945 = vmatprep.subr.bf16.mxu0 0
    %946 = vmatpush1.bf16.xpose.msra.mxu0 0
    %947 = vmatprep.subr.bf16.mxu0 0
    %948 = vmatpush1.bf16.xpose.msra.mxu0 0
    %949 = vmatprep.subr.bf16.mxu0 0
    %950 = vmatpush1.bf16.xpose.msra.mxu0 0
    %951 = vmatprep.subr.bf16.mxu0 0
    %952 = vmatpush1.bf16.xpose.msra.mxu0 0
    %953 = vmatprep.subr.bf16.mxu0 0
    %954 = vmatpush1.bf16.xpose.msra.mxu0 0
    %955 = vmatprep.subr.bf16.mxu0 0
    %956 = vmatpush1.bf16.xpose.msra.mxu0 0
    %957 = vmatprep.subr.bf16.mxu0 0
    %958 = vmatpush1.bf16.xpose.msra.mxu0 0
    %959 = vmatprep.subr.bf16.mxu0 0
    %960 = vmatpush1.bf16.xpose.msra.mxu0 0
    %961 = vmatprep.mubr.bf16.mxu0 0
    %962 = vmatmul.mubr.bf16.gmra.mrb[0].mxu0 %v924
    %v963 = vpop.f32.mrb[0].mxu0
    %v964 = vadd.f32 0.0, %v963
    %v965 = vpop.f32.mrb[0].mxu0
    %v966 = vpop.f32.mrb[0].mxu0
    %v967 = vadd.f32 0.0, %v966
    %v968 = vpop.f32.mrb[0].mxu0
    %969 = vdwg.mxu0
    %v970 = vsel %vm153, %v964, -1e+09
    %v971 = vsel %vm154, %v967, -1e+09
    %v972 = vsel %vm281, %v970, -inf
    %973 = vmax.xlane.f32.xlu0 %v972
    %v974 = vpop.xlane.xlu0 %973
    %v975 = vsel %vm281, %v971, -inf
    %976 = vmax.xlane.f32.xlu0 %v975
    %v977 = vpop.xlane.xlu0 %976
    %v978 = vsub.f32 %v970, %v974
    %v979 = vsub.f32 %v971, %v977
    %v980 = vmul.f32 %v978, 1.442695
    %v981 = vpow.pop %v980
    %v982 = vmul.f32 %v979, 1.442695
    %v983 = vpow.pop %v982
    %v984 = vsel %vm281, %v981, 0.0
    %985 = vadd.xlane.f32.xlu0 %v984
    %v986 = vpop.xlane.xlu0 %985
    %v987 = vsel %vm281, %v983, 0.0
    %988 = vadd.xlane.f32.xlu0 %v987
    %v989 = vpop.xlane.xlu0 %988
    %v990 = vrcp.pop %v986
    %v991 = vmul.f32 %v981, %v990
    %v992 = vrcp.pop %v989
    %v993 = vmul.f32 %v983, %v992
    %v994 = vpack.c.bf16 %v993, %v991
    %v995 = vpack.c.bf16 %v915, %v911
    %v997 = vsel %vm281, %v994, 0
    %999 = vmatprep.subr.bf16.mxu0 0
    %1000 = vmatpush1.bf16.msra.mxu0 %v995
    %1001 = vmatprep.subr.bf16.mxu0 0
    %1002 = vmatpush1.bf16.msra.mxu0 0
    %1003 = vmatprep.subr.bf16.mxu0 0
    %1004 = vmatpush1.bf16.msra.mxu0 0
    %1005 = vmatprep.subr.bf16.mxu0 0
    %1006 = vmatpush1.bf16.msra.mxu0 0
    %1007 = vmatprep.subr.bf16.mxu0 0
    %1008 = vmatpush1.bf16.msra.mxu0 0
    %1009 = vmatprep.subr.bf16.mxu0 0
    %1010 = vmatpush1.bf16.msra.mxu0 0
    %1011 = vmatprep.subr.bf16.mxu0 0
    %1012 = vmatpush1.bf16.msra.mxu0 0
    %1013 = vmatprep.subr.bf16.mxu0 0
    %1014 = vmatpush1.bf16.msra.mxu0 0
    %1015 = vmatprep.subr.bf16.mxu0 0
    %1016 = vmatpush1.bf16.msra.mxu0 0
    %1017 = vmatprep.subr.bf16.mxu0 0
    %1018 = vmatpush1.bf16.msra.mxu0 0
    %1019 = vmatprep.subr.bf16.mxu0 0
    %1020 = vmatpush1.bf16.msra.mxu0 0
    %1021 = vmatprep.subr.bf16.mxu0 0
    %1022 = vmatpush1.bf16.msra.mxu0 0
    %1023 = vmatprep.subr.bf16.mxu0 0
    %1024 = vmatpush1.bf16.msra.mxu0 0
    %1025 = vmatprep.subr.bf16.mxu0 0
    %1026 = vmatpush1.bf16.msra.mxu0 0
    %1027 = vmatprep.subr.bf16.mxu0 0
    %1028 = vmatpush1.bf16.msra.mxu0 0
    %1029 = vmatprep.subr.bf16.mxu0 0
    %1030 = vmatpush1.bf16.msra.mxu0 0
    %1031 = vmatprep.mubr.bf16.mxu0 0
    %1032 = vmatmul.mubr.bf16.gmra.mrb[0].mxu0 %v997
    %v1033 = vpop.f32.mrb[0].mxu0
    %v1034 = vadd.f32 0.0, %v1033
    %v1035 = vpop.f32.mrb[0].mxu0
    %v1036 = vpop.f32.mrb[0].mxu0
    %v1037 = vadd.f32 0.0, %v1036
    %v1038 = vpop.f32.mrb[0].mxu0
    %1039 = vdwg.mxu0
    %1040 = vrot.lane.b32.xlu0 %v919, 96
    %v1041 = vpop.permute.xlu0 %1040
    %1042 = vrot.lane.b32.xlu0 %v919, 32
    %v1043 = vpop.permute.xlu0 %1042
    %v1045 = vsel %vm146, %v1041, 0
    %v1048 = vsel %vm146, %v1043, 0
    %1050 = vmatprep.subr.bf16.mxu0 0
    %1051 = vmatpush1.bf16.xpose.msra.mxu0 %v1048
    %1052 = vmatprep.subr.bf16.mxu0 0
    %1053 = vmatpush1.bf16.xpose.msra.mxu0 0
    %1054 = vmatprep.subr.bf16.mxu0 0
    %1055 = vmatpush1.bf16.xpose.msra.mxu0 0
    %1056 = vmatprep.subr.bf16.mxu0 0
    %1057 = vmatpush1.bf16.xpose.msra.mxu0 0
    %1058 = vmatprep.subr.bf16.mxu0 0
    %1059 = vmatpush1.bf16.xpose.msra.mxu0 0
    %1060 = vmatprep.subr.bf16.mxu0 0
    %1061 = vmatpush1.bf16.xpose.msra.mxu0 0
    %1062 = vmatprep.subr.bf16.mxu0 0
    %1063 = vmatpush1.bf16.xpose.msra.mxu0 0
    %1064 = vmatprep.subr.bf16.mxu0 0
    %1065 = vmatpush1.bf16.xpose.msra.mxu0 0
    %1066 = vmatprep.subr.bf16.mxu0 0
    %1067 = vmatpush1.bf16.xpose.msra.mxu0 0
    %1068 = vmatprep.subr.bf16.mxu0 0
    %1069 = vmatpush1.bf16.xpose.msra.mxu0 0
    %1070 = vmatprep.subr.bf16.mxu0 0
    %1071 = vmatpush1.bf16.xpose.msra.mxu0 0
    %1072 = vmatprep.subr.bf16.mxu0 0
    %1073 = vmatpush1.bf16.xpose.msra.mxu0 0
    %1074 = vmatprep.subr.bf16.mxu0 0
    %1075 = vmatpush1.bf16.xpose.msra.mxu0 0
    %1076 = vmatprep.subr.bf16.mxu0 0
    %1077 = vmatpush1.bf16.xpose.msra.mxu0 0
    %1078 = vmatprep.subr.bf16.mxu0 0
    %1079 = vmatpush1.bf16.xpose.msra.mxu0 0
    %1080 = vmatprep.subr.bf16.mxu0 0
    %1081 = vmatpush1.bf16.xpose.msra.mxu0 0
    %1082 = vmatprep.mubr.bf16.mxu0 0
    %1083 = vmatmul.mubr.bf16.gmra.mrb[0].mxu0 %v1045
    %v1084 = vpop.f32.mrb[0].mxu0
    %v1085 = vadd.f32 0.0, %v1084
    %v1086 = vpop.f32.mrb[0].mxu0
    %v1087 = vpop.f32.mrb[0].mxu0
    %v1088 = vadd.f32 0.0, %v1087
    %v1089 = vpop.f32.mrb[0].mxu0
    %1090 = vdwg.mxu0
    %v1091 = vsel %vm153, %v1085, -1e+09
    %v1092 = vsel %vm154, %v1088, -1e+09
    %v1093 = vsel %vm281, %v1091, -inf
    %1094 = vmax.xlane.f32.xlu0 %v1093
    %v1095 = vpop.xlane.xlu0 %1094
    %v1096 = vsel %vm281, %v1092, -inf
    %1097 = vmax.xlane.f32.xlu0 %v1096
    %v1098 = vpop.xlane.xlu0 %1097
    %v1099 = vsub.f32 %v1091, %v1095
    %v1100 = vsub.f32 %v1092, %v1098
    %v1101 = vmul.f32 %v1099, 1.442695
    %v1102 = vpow.pop %v1101
    %v1103 = vmul.f32 %v1100, 1.442695
    %v1104 = vpow.pop %v1103
    %v1105 = vsel %vm281, %v1102, 0.0
    %1106 = vadd.xlane.f32.xlu0 %v1105
    %v1107 = vpop.xlane.xlu0 %1106
    %v1108 = vsel %vm281, %v1104, 0.0
    %1109 = vadd.xlane.f32.xlu0 %v1108
    %v1110 = vpop.xlane.xlu0 %1109
    %v1111 = vrcp.pop %v1107
    %v1112 = vmul.f32 %v1102, %v1111
    %v1113 = vrcp.pop %v1110
    %v1114 = vmul.f32 %v1104, %v1113
    %v1115 = vpack.c.bf16 %v1114, %v1112
    %1117 = vrot.lane.b32.xlu0 %v995, 96
    %v1118 = vpop.permute.xlu0 %1117
    %v1121 = vsel %vm281, %v1115, 0
    %1123 = vmatprep.subr.bf16.mxu0 0
    %1124 = vmatpush1.bf16.msra.mxu0 %v1118
    %1125 = vmatprep.subr.bf16.mxu0 0
    %1126 = vmatpush1.bf16.msra.mxu0 0
    %1127 = vmatprep.subr.bf16.mxu0 0
    %1128 = vmatpush1.bf16.msra.mxu0 0
    %1129 = vmatprep.subr.bf16.mxu0 0
    %1130 = vmatpush1.bf16.msra.mxu0 0
    %1131 = vmatprep.subr.bf16.mxu0 0
    %1132 = vmatpush1.bf16.msra.mxu0 0
    %1133 = vmatprep.subr.bf16.mxu0 0
    %1134 = vmatpush1.bf16.msra.mxu0 0
    %1135 = vmatprep.subr.bf16.mxu0 0
    %1136 = vmatpush1.bf16.msra.mxu0 0
    %1137 = vmatprep.subr.bf16.mxu0 0
    %1138 = vmatpush1.bf16.msra.mxu0 0
    %1139 = vmatprep.subr.bf16.mxu0 0
    %1140 = vmatpush1.bf16.msra.mxu0 0
    %1141 = vmatprep.subr.bf16.mxu0 0
    %1142 = vmatpush1.bf16.msra.mxu0 0
    %1143 = vmatprep.subr.bf16.mxu0 0
    %1144 = vmatpush1.bf16.msra.mxu0 0
    %1145 = vmatprep.subr.bf16.mxu0 0
    %1146 = vmatpush1.bf16.msra.mxu0 0
    %1147 = vmatprep.subr.bf16.mxu0 0
    %1148 = vmatpush1.bf16.msra.mxu0 0
    %1149 = vmatprep.subr.bf16.mxu0 0
    %1150 = vmatpush1.bf16.msra.mxu0 0
    %1151 = vmatprep.subr.bf16.mxu0 0
    %1152 = vmatpush1.bf16.msra.mxu0 0
    %1153 = vmatprep.subr.bf16.mxu0 0
    %1154 = vmatpush1.bf16.msra.mxu0 0
    %1155 = vmatprep.mubr.bf16.mxu0 0
    %1156 = vmatmul.mubr.bf16.gmra.mrb[0].mxu0 %v1121
    %v1157 = vpop.f32.mrb[0].mxu0
    %v1158 = vadd.f32 0.0, %v1157
    %v1159 = vpop.f32.mrb[0].mxu0
    %v1160 = vpop.f32.mrb[0].mxu0
    %v1161 = vadd.f32 0.0, %v1160
    %v1162 = vpop.f32.mrb[0].mxu0
    %1163 = vdwg.mxu0
    %1166 = vrot.lane.b32.xlu0 %v1158, 32
    %v1167 = vpop.permute.xlu0 %1166
    %1168 = vrot.lane.b32.xlu0 %v1161, 32
    %v1169 = vpop.permute.xlu0 %1168
    %v1172 = vsel %vm146, %v1034, %v1167
    %v1173 = vsel %vm146, %v1037, %v1169
    %v1174 = vpack.c.bf16 %v1173, %v1172
    %s1175 = scalar_lea.vmem %s7, 32
    %v1176 = vld [vmem:[%s1175] sm:$0xf]
    %v1177 = vld [vmem:[%s1175 + $0x4] sm:$0xf]
    %v1178 = vld [vmem:[%s1175 + $0x8] sm:$0xf]
    %v1179 = vld [vmem:[%s1175 + $0xc] sm:$0xf]
    %v1180 = vld [vmem:[%s1175 + $0x10] sm:$0xf]
    %v1181 = vld [vmem:[%s1175 + $0x14] sm:$0xf]
    %v1182 = vld [vmem:[%s1175 + $0x18] sm:$0xf]
    %v1183 = vld [vmem:[%s1175 + $0x1c] sm:$0xf]
    %s1184 = scalar_lea.vmem %s8, 1
    %v1185 = vld [vmem:[%s1184] sm:$0x1]
    %v1187 = vlaneseq
    %v1188 = vshrl.u32 %v1187, 7
    %v1189 = vsub.s32 0, %v1188
    %v1190 = vrot.slane %v1185, %v1189
    %v1200 = vunpack.c.l.b16 %v1176
    %v1201 = vunpack.c.l.b16 %v1177
    %v1202 = vunpack.c.l.b16 %v1178
    %v1203 = vunpack.c.l.b16 %v1179
    %v1204 = vunpack.c.l.b16 %v1180
    %v1205 = vunpack.c.l.b16 %v1181
    %v1206 = vunpack.c.l.b16 %v1182
    %v1207 = vunpack.c.l.b16 %v1183
    %v1208 = vpack.c.b16 %v1201, %v1200
    %v1209 = vpack.c.b16 %v1203, %v1202
    %v1210 = vpack.c.b16 %v1205, %v1204
    %v1211 = vpack.c.b16 %v1207, %v1206
    %v1217 = vsel %vm524, %v1174, 0
    %1219 = vmatprep.subr.bf16.mxu0 0
    %1220 = vmatpush1.bf16.msra.mxu0 %v1208
    %1221 = vmatprep.subr.bf16.mxu0 0
    %1222 = vmatpush1.bf16.msra.mxu0 %v1209
    %1223 = vmatprep.subr.bf16.mxu0 0
    %1224 = vmatpush1.bf16.msra.mxu0 %v1210
    %1225 = vmatprep.subr.bf16.mxu0 0
    %1226 = vmatpush1.bf16.msra.mxu0 %v1211
    %1227 = vmatprep.subr.bf16.mxu0 0
    %1228 = vmatpush1.bf16.msra.mxu0 0
    %1229 = vmatprep.subr.bf16.mxu0 0
    %1230 = vmatpush1.bf16.msra.mxu0 0
    %1231 = vmatprep.subr.bf16.mxu0 0
    %1232 = vmatpush1.bf16.msra.mxu0 0
    %1233 = vmatprep.subr.bf16.mxu0 0
    %1234 = vmatpush1.bf16.msra.mxu0 0
    %1235 = vmatprep.subr.bf16.mxu0 0
    %1236 = vmatpush1.bf16.msra.mxu0 0
    %1237 = vmatprep.subr.bf16.mxu0 0
    %1238 = vmatpush1.bf16.msra.mxu0 0
    %1239 = vmatprep.subr.bf16.mxu0 0
    %1240 = vmatpush1.bf16.msra.mxu0 0
    %1241 = vmatprep.subr.bf16.mxu0 0
    %1242 = vmatpush1.bf16.msra.mxu0 0
    %1243 = vmatprep.subr.bf16.mxu0 0
    %1244 = vmatpush1.bf16.msra.mxu0 0
    %1245 = vmatprep.subr.bf16.mxu0 0
    %1246 = vmatpush1.bf16.msra.mxu0 0
    %1247 = vmatprep.subr.bf16.mxu0 0
    %1248 = vmatpush1.bf16.msra.mxu0 0
    %1249 = vmatprep.subr.bf16.mxu0 0
    %1250 = vmatpush1.bf16.msra.mxu0 0
    %1251 = vmatprep.mubr.bf16.mxu0 0
    %1252 = vmatmul.mubr.bf16.gmra.mrb[0].mxu0 %v1217
    %v1253 = vpop.f32.mrb[0].mxu0
    %v1254 = vadd.f32 %v1190, %v1253
    %v1255 = vpop.f32.mrb[0].mxu0
    %v1256 = vpop.f32.mrb[0].mxu0
    %v1257 = vadd.f32 %v1190, %v1256
    %v1258 = vpop.f32.mrb[0].mxu0
    %1259 = vdwg.mxu0
    %v1260 = vadd.f32 %v1254, %v843
    %v1261 = vadd.f32 %v1257, %v844
    %s1262 = scalar_lea.vmem %s9, 1
    %v1263 = vld [vmem:[%s1262] sm:$0x1]
    %s1264 = scalar_lea.vmem %s10, 1
    %v1265 = vld [vmem:[%s1264] sm:$0x1]
    %v1266 = vsel %vm146, %v1260, 0.0
    %1267 = vadd.xlane.f32.xlu0 %v1266
    %v1268 = vpop.xlane.xlu0 %1267
    %v1269 = vsel %vm146, %v1261, 0.0
    %1270 = vadd.xlane.f32.xlu0 %v1269
    %v1271 = vpop.xlane.xlu0 %1270
    %v1272 = vmul.f32 %v1268, %v579
    %v1273 = vmul.f32 %v1271, %v579
    %v1274 = vsub.f32 %v1260, %v1272
    %v1275 = vsub.f32 %v1261, %v1273
    %v1276 = vmul.f32 %v1274, %v1274
    %v1277 = vmul.f32 %v1275, %v1275
    %v1278 = vsel %vm146, %v1276, 0.0
    %1279 = vadd.xlane.f32.xlu0 %v1278
    %v1280 = vpop.xlane.xlu0 %1279
    %v1281 = vsel %vm146, %v1277, 0.0
    %1282 = vadd.xlane.f32.xlu0 %v1281
    %v1283 = vpop.xlane.xlu0 %1282
    %v1284 = vmul.f32 %v1280, %v579
    %v1285 = vmul.f32 %v1283, %v579
    %v1286 = vadd.f32 %v1284, 1e-05
    %v1287 = vadd.f32 %v1285, 1e-05
    %v1288 = vrsqrt.pop %v1286
    %v1289 = vrsqrt.pop %v1287
    %v1290 = vmul.f32 %v1274, %v1288
    %v1291 = vmul.f32 %v1275, %v1289
    %v1293 = vlaneseq
    %v1294 = vshrl.u32 %v1293, 7
    %v1295 = vsub.s32 0, %v1294
    %v1296 = vrot.slane %v1263, %v1295
    %v1298 = vmul.f32 %v1290, %v1296
    %v1299 = vmul.f32 %v1291, %v1296
    %v1301 = vlaneseq
    %v1302 = vshrl.u32 %v1301, 7
    %v1303 = vsub.s32 0, %v1302
    %v1304 = vrot.slane %v1265, %v1303
    %v1306 = vadd.f32 %v1298, %v1304
    %v1307 = vadd.f32 %v1299, %v1304
    %v1308 = vpack.c.bf16 %v1307, %v1306
    %s1309 = scalar_lea.vmem %s13, 16
    %v1310 = vld [vmem:[%s1309] sm:$0xf]
    %v1311 = vld [vmem:[%s1309 + $0x4] sm:$0xf]
    %v1312 = vld [vmem:[%s1309 + $0x8] sm:$0xf]
    %v1313 = vld [vmem:[%s1309 + $0xc] sm:$0xf]
    %s1314 = scalar_lea.vmem %s14, 1
    %v1315 = vld [vmem:[%s1314] sm:$0x1]
    %v1317 = vlaneseq
    %v1318 = vshrl.u32 %v1317, 7
    %v1319 = vsub.s32 0, %v1318
    %v1320 = vrot.slane %v1315, %v1319
    %v1326 = vunpack.c.l.b16 %v1310
    %v1327 = vunpack.c.l.b16 %v1311
    %v1328 = vunpack.c.l.b16 %v1312
    %v1329 = vunpack.c.l.b16 %v1313
    %v1330 = vpack.c.b16 %v1327, %v1326
    %v1331 = vpack.c.b16 %v1329, %v1328
    %v1335 = vsel %vm146, %v1308, 0
    %1337 = vmatprep.subr.bf16.mxu0 0
    %1338 = vmatpush1.bf16.msra.mxu0 %v1330
    %1339 = vmatprep.subr.bf16.mxu0 0
    %1340 = vmatpush1.bf16.msra.mxu0 %v1331
    %1341 = vmatprep.subr.bf16.mxu0 0
    %1342 = vmatpush1.bf16.msra.mxu0 0
    %1343 = vmatprep.subr.bf16.mxu0 0
    %1344 = vmatpush1.bf16.msra.mxu0 0
    %1345 = vmatprep.subr.bf16.mxu0 0
    %1346 = vmatpush1.bf16.msra.mxu0 0
    %1347 = vmatprep.subr.bf16.mxu0 0
    %1348 = vmatpush1.bf16.msra.mxu0 0
    %1349 = vmatprep.subr.bf16.mxu0 0
    %1350 = vmatpush1.bf16.msra.mxu0 0
    %1351 = vmatprep.subr.bf16.mxu0 0
    %1352 = vmatpush1.bf16.msra.mxu0 0
    %1353 = vmatprep.subr.bf16.mxu0 0
    %1354 = vmatpush1.bf16.msra.mxu0 0
    %1355 = vmatprep.subr.bf16.mxu0 0
    %1356 = vmatpush1.bf16.msra.mxu0 0
    %1357 = vmatprep.subr.bf16.mxu0 0
    %1358 = vmatpush1.bf16.msra.mxu0 0
    %1359 = vmatprep.subr.bf16.mxu0 0
    %1360 = vmatpush1.bf16.msra.mxu0 0
    %1361 = vmatprep.subr.bf16.mxu0 0
    %1362 = vmatpush1.bf16.msra.mxu0 0
    %1363 = vmatprep.subr.bf16.mxu0 0
    %1364 = vmatpush1.bf16.msra.mxu0 0
    %1365 = vmatprep.subr.bf16.mxu0 0
    %1366 = vmatpush1.bf16.msra.mxu0 0
    %1367 = vmatprep.subr.bf16.mxu0 0
    %1368 = vmatpush1.bf16.msra.mxu0 0
    %1369 = vmatprep.mubr.bf16.mxu0 0
    %1370 = vmatmul.mubr.bf16.gmra.mrb[0].mxu0 %v1335
    %v1371 = vpop.f32.mrb[0].mxu0
    %v1372 = vadd.f32 %v1320, %v1371
    %v1373 = vpop.f32.mrb[0].mxu0
    %v1374 = vpop.f32.mrb[0].mxu0
    %v1375 = vadd.f32 %v1320, %v1374
    %v1376 = vpop.f32.mrb[0].mxu0
    %1377 = vdwg.mxu0
    %v1378 = vmax.f32 %v1372, 0.0
    %v1379 = vmax.f32 %v1375, 0.0
    %v1380 = vpack.c.bf16 %v1379, %v1378
    %s1381 = scalar_lea.vmem %s15, 64
    %v1382 = vld [vmem:[%s1381] sm:$0xf]
    %v1383 = vld [vmem:[%s1381 + $0x4] sm:$0xf]
    %v1384 = vld [vmem:[%s1381 + $0x8] sm:$0xf]
    %v1385 = vld [vmem:[%s1381 + $0xc] sm:$0xf]
    %v1386 = vld [vmem:[%s1381 + $0x10] sm:$0xf]
    %v1387 = vld [vmem:[%s1381 + $0x14] sm:$0xf]
    %v1388 = vld [vmem:[%s1381 + $0x18] sm:$0xf]
    %v1389 = vld [vmem:[%s1381 + $0x1c] sm:$0xf]
    %v1390 = vld [vmem:[%s1381 + $0x20] sm:$0xf]
    %v1391 = vld [vmem:[%s1381 + $0x24] sm:$0xf]
    %v1392 = vld [vmem:[%s1381 + $0x28] sm:$0xf]
    %v1393 = vld [vmem:[%s1381 + $0x2c] sm:$0xf]
    %v1394 = vld [vmem:[%s1381 + $0x30] sm:$0xf]
    %v1395 = vld [vmem:[%s1381 + $0x34] sm:$0xf]
    %v1396 = vld [vmem:[%s1381 + $0x38] sm:$0xf]
    %v1397 = vld [vmem:[%s1381 + $0x3c] sm:$0xf]
    %s1398 = scalar_lea.vmem %s16, 1
    %v1399 = vld [vmem:[%s1398] sm:$0x1]
    %v1401 = vlaneseq
    %v1402 = vshrl.u32 %v1401, 7
    %v1403 = vsub.s32 0, %v1402
    %v1404 = vrot.slane %v1399, %v1403
    %v1422 = vunpack.c.l.b16 %v1382
    %v1423 = vunpack.c.l.b16 %v1383
    %v1424 = vunpack.c.l.b16 %v1384
    %v1425 = vunpack.c.l.b16 %v1385
    %v1426 = vunpack.c.l.b16 %v1386
    %v1427 = vunpack.c.l.b16 %v1387
    %v1428 = vunpack.c.l.b16 %v1388
    %v1429 = vunpack.c.l.b16 %v1389
    %v1430 = vunpack.c.l.b16 %v1390
    %v1431 = vunpack.c.l.b16 %v1391
    %v1432 = vunpack.c.l.b16 %v1392
    %v1433 = vunpack.c.l.b16 %v1393
    %v1434 = vunpack.c.l.b16 %v1394
    %v1435 = vunpack.c.l.b16 %v1395
    %v1436 = vunpack.c.l.b16 %v1396
    %v1437 = vunpack.c.l.b16 %v1397
    %v1438 = vpack.c.b16 %v1423, %v1422
    %v1439 = vpack.c.b16 %v1425, %v1424
    %v1440 = vpack.c.b16 %v1427, %v1426
    %v1441 = vpack.c.b16 %v1429, %v1428
    %v1442 = vpack.c.b16 %v1431, %v1430
    %v1443 = vpack.c.b16 %v1433, %v1432
    %v1444 = vpack.c.b16 %v1435, %v1434
    %v1445 = vpack.c.b16 %v1437, %v1436
    %1454 = vmatprep.subr.bf16.mxu0 0
    %1455 = vmatpush1.bf16.msra.mxu0 %v1438
    %1456 = vmatprep.subr.bf16.mxu0 0
    %1457 = vmatpush1.bf16.msra.mxu0 %v1439
    %1458 = vmatprep.subr.bf16.mxu0 0
    %1459 = vmatpush1.bf16.msra.mxu0 %v1440
    %1460 = vmatprep.subr.bf16.mxu0 0
    %1461 = vmatpush1.bf16.msra.mxu0 %v1441
    %1462 = vmatprep.subr.bf16.mxu0 0
    %1463 = vmatpush1.bf16.msra.mxu0 %v1442
    %1464 = vmatprep.subr.bf16.mxu0 0
    %1465 = vmatpush1.bf16.msra.mxu0 %v1443
    %1466 = vmatprep.subr.bf16.mxu0 0
    %1467 = vmatpush1.bf16.msra.mxu0 %v1444
    %1468 = vmatprep.subr.bf16.mxu0 0
    %1469 = vmatpush1.bf16.msra.mxu0 %v1445
    %1470 = vmatprep.subr.bf16.mxu0 0
    %1471 = vmatpush1.bf16.msra.mxu0 0
    %1472 = vmatprep.subr.bf16.mxu0 0
    %1473 = vmatpush1.bf16.msra.mxu0 0
    %1474 = vmatprep.subr.bf16.mxu0 0
    %1475 = vmatpush1.bf16.msra.mxu0 0
    %1476 = vmatprep.subr.bf16.mxu0 0
    %1477 = vmatpush1.bf16.msra.mxu0 0
    %1478 = vmatprep.subr.bf16.mxu0 0
    %1479 = vmatpush1.bf16.msra.mxu0 0
    %1480 = vmatprep.subr.bf16.mxu0 0
    %1481 = vmatpush1.bf16.msra.mxu0 0
    %1482 = vmatprep.subr.bf16.mxu0 0
    %1483 = vmatpush1.bf16.msra.mxu0 0
    %1484 = vmatprep.subr.bf16.mxu0 0
    %1485 = vmatpush1.bf16.msra.mxu0 0
    %1486 = vmatprep.mubr.bf16.mxu0 0
    %1487 = vmatmul.mubr.bf16.gmra.mrb[0].mxu0 %v1380
    %v1488 = vpop.f32.mrb[0].mxu0
    %v1489 = vadd.f32 %v1404, %v1488
    %v1490 = vpop.f32.mrb[0].mxu0
    %v1491 = vpop.f32.mrb[0].mxu0
    %v1492 = vadd.f32 %v1404, %v1491
    %v1493 = vpop.f32.mrb[0].mxu0
    %1494 = vdwg.mxu0
    %v1495 = vadd.f32 %v1489, %v1306
    %v1496 = vadd.f32 %v1492, %v1307
    %s1497 = scalar_lea.vmem %s11, 1
    %v1498 = vld [vmem:[%s1497] sm:$0x1]
    %s1499 = scalar_lea.vmem %s12, 1
    %v1500 = vld [vmem:[%s1499] sm:$0x1]
    %v1501 = vsel %vm146, %v1495, 0.0
    %1502 = vadd.xlane.f32.xlu0 %v1501
    %v1503 = vpop.xlane.xlu0 %1502
    %v1504 = vsel %vm146, %v1496, 0.0
    %1505 = vadd.xlane.f32.xlu0 %v1504
    %v1506 = vpop.xlane.xlu0 %1505
    %v1507 = vmul.f32 %v1503, %v579
    %v1508 = vmul.f32 %v1506, %v579
    %v1509 = vsub.f32 %v1495, %v1507
    %v1510 = vsub.f32 %v1496, %v1508
    %v1511 = vmul.f32 %v1509, %v1509
    %v1512 = vmul.f32 %v1510, %v1510
    %v1513 = vsel %vm146, %v1511, 0.0
    %1514 = vadd.xlane.f32.xlu0 %v1513
    %v1515 = vpop.xlane.xlu0 %1514
    %v1516 = vsel %vm146, %v1512, 0.0
    %1517 = vadd.xlane.f32.xlu0 %v1516
    %v1518 = vpop.xlane.xlu0 %1517
    %v1519 = vmul.f32 %v1515, %v579
    %v1520 = vmul.f32 %v1518, %v579
    %v1521 = vadd.f32 %v1519, 1e-05
    %v1522 = vadd.f32 %v1520, 1e-05
    %v1523 = vrsqrt.pop %v1521
    %v1524 = vrsqrt.pop %v1522
    %v1525 = vmul.f32 %v1509, %v1523
    %v1526 = vmul.f32 %v1510, %v1524
    %v1528 = vlaneseq
    %v1529 = vshrl.u32 %v1528, 7
    %v1530 = vsub.s32 0, %v1529
    %v1531 = vrot.slane %v1498, %v1530
    %v1533 = vmul.f32 %v1525, %v1531
    %v1534 = vmul.f32 %v1526, %v1531
    %v1536 = vlaneseq
    %v1537 = vshrl.u32 %v1536, 7
    %v1538 = vsub.s32 0, %v1537
    %v1539 = vrot.slane %v1500, %v1538
    %v1541 = vadd.f32 %v1533, %v1539
    %v1542 = vadd.f32 %v1534, %v1539
    %v1543 = vpack.c.bf16 %v1542, %v1541
    %v1544 = vld [vmem:[%s17] sm:$0xf]
    %v1545 = vld [vmem:[%s17 + $0x4] sm:$0xf]
    %v1546 = vld [vmem:[%s17 + $0x8] sm:$0xf]
    %v1547 = vld [vmem:[%s17 + $0xc] sm:$0xf]
    %v1548 = vld [vmem:[%s18] sm:$0x1]
    %v1550 = vlaneseq
    %v1551 = vshrl.u32 %v1550, 7
    %v1552 = vsub.s32 0, %v1551
    %v1553 = vrot.slane %v1548, %v1552
    %v1559 = vunpack.c.l.b16 %v1544
    %v1560 = vunpack.c.l.b16 %v1545
    %v1561 = vunpack.c.l.b16 %v1546
    %v1562 = vunpack.c.l.b16 %v1547
    %v1563 = vpack.c.b16 %v1560, %v1559
    %v1564 = vpack.c.b16 %v1562, %v1561
    %v1568 = vsel %vm146, %v1543, 0
    %1570 = vmatprep.subr.bf16.mxu0 0
    %1571 = vmatpush1.bf16.msra.mxu0 %v1563
    %1572 = vmatprep.subr.bf16.mxu0 0
    %1573 = vmatpush1.bf16.msra.mxu0 %v1564
    %1574 = vmatprep.subr.bf16.mxu0 0
    %1575 = vmatpush1.bf16.msra.mxu0 0
    %1576 = vmatprep.subr.bf16.mxu0 0
    %1577 = vmatpush1.bf16.msra.mxu0 0
    %1578 = vmatprep.subr.bf16.mxu0 0
    %1579 = vmatpush1.bf16.msra.mxu0 0
    %1580 = vmatprep.subr.bf16.mxu0 0
    %1581 = vmatpush1.bf16.msra.mxu0 0
    %1582 = vmatprep.subr.bf16.mxu0 0
    %1583 = vmatpush1.bf16.msra.mxu0 0
    %1584 = vmatprep.subr.bf16.mxu0 0
    %1585 = vmatpush1.bf16.msra.mxu0 0
    %1586 = vmatprep.subr.bf16.mxu0 0
    %1587 = vmatpush1.bf16.msra.mxu0 0
    %1588 = vmatprep.subr.bf16.mxu0 0
    %1589 = vmatpush1.bf16.msra.mxu0 0
    %1590 = vmatprep.subr.bf16.mxu0 0
    %1591 = vmatpush1.bf16.msra.mxu0 0
    %1592 = vmatprep.subr.bf16.mxu0 0
    %1593 = vmatpush1.bf16.msra.mxu0 0
    %1594 = vmatprep.subr.bf16.mxu0 0
    %1595 = vmatpush1.bf16.msra.mxu0 0
    %1596 = vmatprep.subr.bf16.mxu0 0
    %1597 = vmatpush1.bf16.msra.mxu0 0
    %1598 = vmatprep.subr.bf16.mxu0 0
    %1599 = vmatpush1.bf16.msra.mxu0 0
    %1600 = vmatprep.subr.bf16.mxu0 0
    %1601 = vmatpush1.bf16.msra.mxu0 0
    %1602 = vmatprep.mubr.bf16.mxu0 0
    %1603 = vmatmul.mubr.bf16.gmra.mrb[0].mxu0 %v1568
    %v1604 = vpop.f32.mrb[0].mxu0
    %v1605 = vadd.f32 %v1553, %v1604
    %v1606 = vpop.f32.mrb[0].mxu0
    %v1607 = vpop.f32.mrb[0].mxu0
    %v1608 = vadd.f32 %v1553, %v1607
    %v1609 = vpop.f32.mrb[0].mxu0
    %1610 = vdwg.mxu0
    %1611 = vst [vmem:[#allocation2] sm:$0xff] %v1605
    %1612 = vst [vmem:[#allocation2 + $0x8] sm:$0xff] %v1608
    // Predicated region
    $region78: #{tpu_custom_call.1} parent=1 // pred_check
      _
    $region79: #{tpu_custom_call.1} parent=1 // pred_check_branch
      %1614 = sbr.rel (0) target = $region81
    $region80: #{tpu_custom_call.1} parent=1 // pred_region
      %s1616 = ssub.s32 256, 256
      %1617 = vsyncadd [#allocation3], %s1616
      %s1618 = sshll.u32 [#allocation2], 4
      %s1619 = int_to_ptr.vmem [resolvable:$true] %s1618
      %1624 = dma.vmem_to_hbm [thread:$0]  %s1619, 256, %s19, [#allocation3], 128, 128, 8
    $region81: #{tpu_custom_call.1} parent=1 // pred_fallthru
      _
    // Predicated region
    $region82: #{tpu_custom_call.1} parent=1 // pred_check
      _
    $region83: #{tpu_custom_call.1} parent=1 // pred_check_branch
      %1626 = sbr.rel (0) target = $region85
    $region84: #{tpu_custom_call.1} parent=1 // pred_region
      %s1628 = ssub.s32 256, 256
      %1629 = vsyncadd [#allocation5], %s1628
      %s1630 = sshll.u32 [#allocation4], 4
      %s1631 = int_to_ptr.vmem [resolvable:$true] %s1630
      %1636 = dma.vmem_to_hbm [thread:$0]  %s1631, 256, %s20, [#allocation5], 128, 128, 8
    $region85: #{tpu_custom_call.1} parent=1 // pred_fallthru
      _
    // Predicated region
    $region86: #{tpu_custom_call.1} parent=1 // pred_check
      _
    $region87: #{tpu_custom_call.1} parent=1 // pred_check_branch
      %1638 = sbr.rel (0) target = $region89
    $region88: #{tpu_custom_call.1} parent=1 // pred_region
      %1639 = dma.done [#allocation3], 256
    $region89: #{tpu_custom_call.1} parent=1 // pred_fallthru
      _
    // Predicated region
    $region90: #{tpu_custom_call.1} parent=1 // pred_check
      _
    $region91: #{tpu_custom_call.1} parent=1 // pred_check_branch
      %1641 = sbr.rel (0) target = $region93
    $region92: #{tpu_custom_call.1} parent=1 // pred_region
      %1642 = dma.done [#allocation5], 256
    $region93: #{tpu_custom_call.1} parent=1 // pred_fallthru
      _
    %1643 = vsyncpa [#allocation3], 1
    %1644 = vsyncpa [#allocation5], 1

</llo_original>
